<compile_context>
chip_gen: v7x
topology: tpu7x:2x2x1
jax: 0.10.0
libtpu: 0.0.40
codegen_flags: <defaults>
</compile_context>

<pallas_src>
import math
from functools import partial

import jax
import jax.numpy as jnp
from jax import lax
from jax.experimental import pallas as pl
from jax.experimental.pallas import tpu as pltpu


def _round_up(a, b):
    return (a + b - 1) // b * b


# ----------------------------------------------------------------------------
# Pallas kernel
# ----------------------------------------------------------------------------
def lopkm_kernel(x_ref, proj_rhs_ref, proj_bias_ref, k1_ref, k2_ref, ksqdw_ref,
                 out_ref, *, heads, k_dim, n_keys, knn):
    half = k_dim // 2
    N = n_keys
    HK = heads * k_dim
    x = x_ref[...]
    bs = x.shape[0]
    int_max = jnp.int32(jnp.iinfo(jnp.int32).max)
    inv_kdim = jnp.float32(1.0 / k_dim)

    # --- 1) one fused MXU matmul: all-head query projection + head distances --
    proj = jnp.dot(x, proj_rhs_ref[...],
                   preferred_element_type=jnp.float32) + proj_bias_ref[...]
    q_all = proj[:, :HK]                      # (bs, heads*k_dim) f32
    head_dist = proj[:, HK:]                  # (bs, heads): ||hc||^2 - 2 x.hc

    # head assignment: argmin_h ||x - hc_h||^2  (||x||^2 constant per row).
    h_iota = lax.broadcasted_iota(jnp.int32, (bs, heads), 1)
    min_d = jnp.min(head_dist, axis=1, keepdims=True)
    head_col = jnp.min(jnp.where(head_dist == min_d, h_iota, heads),
                       axis=1, keepdims=True)                      # (bs, 1)

    # --- 2) per-row ||k||^2 rows and dist_w via one tiny one-hot matmul ------
    onehot = (head_col == h_iota).astype(jnp.float32)              # (bs, heads)
    ksqdw = jnp.dot(onehot, ksqdw_ref[...],
                    preferred_element_type=jnp.float32)            # (bs, 2N+1)
    ksq1 = ksqdw[:, :N]
    ksq2 = ksqdw[:, N:2 * N]
    dw = ksqdw[:, 2 * N:]                                          # (bs, 1)

    # --- 3) head-masked cross terms: accumulate (bs, N), never (bs, heads*N) --
    mxu_dtype = k1_ref.dtype
    cross1 = jnp.zeros((bs, N), jnp.float32)
    cross2 = jnp.zeros((bs, N), jnp.float32)
    q1_sel = jnp.zeros((bs, half), jnp.float32)
    q2_sel = jnp.zeros((bs, half), jnp.float32)
    for h in range(heads):
        m = head_col == h
        qh = q_all[:, h * k_dim:(h + 1) * k_dim]
        q1h = jnp.where(m, qh[:, :half], 0.0)
        q2h = jnp.where(m, qh[:, half:], 0.0)
        q1_sel = q1_sel + q1h
        q2_sel = q2_sel + q2h
        # keys already carry the -2 factor (folded at precompute time)
        cross1 = cross1 + jnp.dot(q1h.astype(mxu_dtype),
                                  k1_ref[:, h * N:(h + 1) * N],
                                  preferred_element_type=jnp.float32)
        cross2 = cross2 + jnp.dot(q2h.astype(mxu_dtype),
                                  k2_ref[:, h * N:(h + 1) * N],
                                  preferred_element_type=jnp.float32)
    q1sq = jnp.sum(q1_sel * q1_sel, axis=1, keepdims=True)
    q2sq = jnp.sum(q2_sel * q2_sel, axis=1, keepdims=True)

    # ||q - k||^2 / k_dim via ||q||^2 - 2 q.k + ||k||^2 (clamp fp noise).
    d1 = jnp.maximum(q1sq + cross1 + ksq1, 0.0) * inv_kdim         # (bs, N)
    d2 = jnp.maximum(q2sq + cross2 + ksq2, 0.0) * inv_kdim

    # --- 4) top-knn with (distance, index) packed into ONE int32 key ---------
    # Non-negative f32 bit patterns are monotone in the value, so the low
    # mantissa bits are truncated and replaced by the lane index: one cross-lane
    # MIN per iteration replaces max + argmax(+gather).
    lane_knn = lax.broadcasted_iota(jnp.int32, (bs, knn), 1)

    def packed_topk_min(dist, n_lanes):
        bits = max((n_lanes - 1).bit_length(), 1)
        lowmask = jnp.int32((1 << bits) - 1)
        himask = jnp.int32(-(1 << bits))
        lane = lax.broadcasted_iota(jnp.int32, dist.shape, 1)
        keys0 = (pltpu.bitcast(dist, jnp.int32) & himask) | lane

        def body(j, carry):
            keys, vals, idxs = carry
            kmin = jnp.min(keys, axis=1, keepdims=True)            # 1 XLU reduce
            write = lane_knn == j
            vals = jnp.where(write,
                             pltpu.bitcast(kmin & himask, jnp.float32), vals)
            idxs = jnp.where(write, kmin & lowmask, idxs)
            keys = jnp.where(keys == kmin, int_max, keys)          # unique winner
            return keys, vals, idxs

        init = (keys0, jnp.zeros((bs, knn), jnp.float32),
                jnp.zeros((bs, knn), jnp.int32))
        _, vals, idxs = lax.fori_loop(0, knn, body, init, unroll=True)
        return vals, idxs

    d1_top, i1 = packed_topk_min(d1, N)        # ascending distance
    d2_top, i2 = packed_topk_min(d2, N)

    # --- 5) cartesian combination via broadcasting, final top-knn ------------
    K2 = knn * knn
    all_d = (d1_top[:, :, None] + d2_top[:, None, :]).reshape(bs, K2)
    all_gi = (i1[:, :, None] * N + i2[:, None, :]).reshape(bs, K2)

    bits2 = max((K2 - 1).bit_length(), 1)
    himask2 = jnp.int32(-(1 << bits2))
    pos = lax.broadcasted_iota(jnp.int32, (bs, K2), 1)
    keys2 = (pltpu.bitcast(all_d, jnp.int32) & himask2) | pos

    def body2(j, carry):
        keys, vals, gidx = carry
        kmin = jnp.min(keys, axis=1, keepdims=True)                # 1 XLU reduce
        sel = keys == kmin                                         # unique winner
        gi = jnp.sum(jnp.where(sel, all_gi, 0), axis=1, keepdims=True)
        write = lane_knn == j
        vals = jnp.where(write, pltpu.bitcast(kmin & himask2, jnp.float32), vals)
        gidx = jnp.where(write, gi, gidx)
        keys = jnp.where(sel, int_max, keys)
        return keys, vals, gidx

    init2 = (keys2, jnp.zeros((bs, knn), jnp.float32),
             jnp.zeros((bs, knn), jnp.int32))
    _, d_top, gidx = lax.fori_loop(0, knn, body2, init2, unroll=True)

    # --- 6) scores = -sqrt(d) * dist_w[head]; softmax over knn ---------------
    scores = -jnp.sqrt(d_top) * dw
    mx = jnp.max(scores, axis=1, keepdims=True)
    e = jnp.exp(scores - mx)
    p = e * pl.reciprocal(jnp.sum(e, axis=1, keepdims=True), approx=True)

    gidx = gidx + head_col * (N * N)
    # single lane-denser int32 writeback: [bitcast(weights) | global indices]
    out_ref[...] = jnp.concatenate([pltpu.bitcast(p, jnp.int32), gidx], axis=1)


# ----------------------------------------------------------------------------
# Parameter init (mirrors the module's __init__) and one-time operand prep
# ----------------------------------------------------------------------------
def make_params(key, *, input_dim, v_dim, k_dim, n_keys, heads):
    half = k_dim // 2
    ks = jax.random.split(key, 5)
    keys_p = jax.random.uniform(ks[0], (heads, 2, n_keys, half), jnp.float32,
                                minval=1.0 / math.sqrt(half), maxval=1.0)
    values = (jax.random.normal(ks[1], (heads * n_keys ** 2, v_dim), jnp.float32)
              * (v_dim ** -0.5))
    dist_w = jnp.full((1, heads), math.sqrt(2 * k_dim), jnp.float32)
    head_center = jax.random.normal(ks[2], (heads, input_dim), jnp.float32)
    bound = 1.0 / math.sqrt(input_dim)
    W = jax.random.uniform(ks[3], (heads, k_dim, input_dim), jnp.float32,
                           minval=-bound, maxval=bound)
    bias = jax.random.uniform(ks[4], (heads, k_dim), jnp.float32,
                              minval=-bound, maxval=bound)
    return dict(keys=keys_p, values=values, dist_w=dist_w,
                head_center=head_center, W=W, bias=bias)


def prepare_lopkm_operands(params, *, k_dim, n_keys, heads,
                           param_dtype=jnp.bfloat16):
    """One-time fold/transpose of parameters into kernel operands (hoisted out
    of the forward pass).  `param_dtype` sets the MXU-input dtype of the large
    operands; row vectors stay f32 and all matmuls accumulate in f32."""
    hc = params['head_center'].astype(jnp.float32)      # (heads, D)
    W = params['W'].astype(jnp.float32)                 # (heads, k_dim, D)
    bias = params['bias'].astype(jnp.float32)           # (heads, k_dim)
    keys = params['keys'].astype(jnp.float32)           # (heads, 2, N, half)
    dist_w = params['dist_w'].astype(jnp.float32).reshape(-1, 1)   # (heads, 1)
    D = hc.shape[1]
    half = k_dim // 2
    N = n_keys

    # fused projection RHS: [ W^T for every head | -2 * hc^T ]
    wT = jnp.transpose(W, (2, 0, 1)).reshape(D, heads * k_dim)
    hcT = jnp.transpose(hc, (1, 0))
    proj_rhs = jnp.concatenate([wT, -2.0 * hcT], axis=1).astype(param_dtype)
    # fused bias row: [ b_h - hc_h @ W_h^T | ||hc_h||^2 ]  (kept f32)
    b_eff = (bias - jnp.einsum('hd,hkd->hk', hc, W,
                               precision=lax.Precision.HIGHEST)
             ).reshape(1, heads * k_dim)
    hc_sq = jnp.sum(hc * hc, axis=1).reshape(1, heads)
    proj_bias = jnp.concatenate([b_eff, hc_sq], axis=1)

    k1 = keys[:, 0]                                      # (heads, N, half)
    k2 = keys[:, 1]
    k1T = jnp.transpose(k1, (2, 0, 1)).reshape(half, heads * N)
    k2T = jnp.transpose(k2, (2, 0, 1)).reshape(half, heads * N)
    k1n = (-2.0 * k1T).astype(param_dtype)               # -2 folded in
    k2n = (-2.0 * k2T).astype(param_dtype)
    ksq1 = jnp.sum(k1 * k1, axis=2)                      # (heads, N) f32
    ksq2 = jnp.sum(k2 * k2, axis=2)
    ksqdw = jnp.concatenate([ksq1, ksq2, dist_w], axis=1)  # (heads, 2N+1) f32
    return dict(proj_rhs=proj_rhs, proj_bias=proj_bias,
                k1n=k1n, k2n=k2n, ksqdw=ksqdw)


def _vmem_limit_bytes(tile, D, heads, k_dim, n_keys, knn, param_bytes):
    N = n_keys
    half = k_dim // 2
    hk1 = heads * (k_dim + 1)
    resident = ((D * hk1 + 2 * half * heads * N) * param_bytes
                + (hk1 + heads * (2 * N + 1)) * 4)
    streamed = tile * D * param_bytes + tile * 2 * knn * 4
    working = tile * (hk1 + 10 * N + 4 * knn * knn + 10 * knn) * 4
    est = 2 * (resident + streamed) + working            # double-buffered blocks
    return int(min(64 << 20, max(32 << 20, 2 * est + (4 << 20))))


# ----------------------------------------------------------------------------
# Forward pass wrapper
# ----------------------------------------------------------------------------
def lopkm_forward(x, operands, values, *, k_dim, n_keys, heads, knn, bs_tile=256):
    prefix_shape = x.shape[:-1]
    D = x.shape[-1]
    param_dtype = operands['proj_rhs'].dtype
    v_dim = values.shape[1]
    x2 = x.reshape(-1, D).astype(param_dtype)            # stream x at MXU dtype
    bs = x2.shape[0]

    # Keep >= 2 grid steps when possible so the 'parallel' axis can shard
    # across both v7x TensorCores; cap the tile at bs_tile.
    tile = max(8, min(_round_up(bs_tile, 8), _round_up(pl.cdiv(bs, 2), 8)))
    bs_pad = _round_up(bs, tile)
    if bs_pad != bs:
        x2 = jnp.pad(x2, ((0, bs_pad - bs), (0, 0)))

    kernel = partial(lopkm_kernel, heads=heads, k_dim=k_dim,
                     n_keys=n_keys, knn=knn)
    const = lambda i: (0, 0)
    packed = pl.pallas_call(
        kernel,
        out_shape=jax.ShapeDtypeStruct((bs_pad, 2 * knn), jnp.int32),
        grid=(bs_pad // tile,),
        in_specs=[
            pl.BlockSpec((tile, D), lambda i: (i, 0)),              # x tile
            pl.BlockSpec((D, heads * (k_dim + 1)), const),          # [W^T | -2 hc^T]
            pl.BlockSpec((1, heads * (k_dim + 1)), const),          # fused bias row
            pl.BlockSpec((k_dim // 2, heads * n_keys), const),      # -2 * subkeys1^T
            pl.BlockSpec((k_dim // 2, heads * n_keys), const),      # -2 * subkeys2^T
            pl.BlockSpec((heads, 2 * n_keys + 1), const),           # [||k1||^2 | ||k2||^2 | dw]
        ],
        out_specs=pl.BlockSpec((tile, 2 * knn), lambda i: (i, 0)),
        compiler_params=pltpu.CompilerParams(
            dimension_semantics=("parallel",),
            vmem_limit_bytes=_vmem_limit_bytes(
                tile, D, heads, k_dim, n_keys, knn,
                jnp.dtype(param_dtype).itemsize)),
    )(x2, operands['proj_rhs'], operands['proj_bias'],
      operands['k1n'], operands['k2n'], operands['ksqdw'])

    packed = packed[:bs]
    scores = lax.bitcast_convert_type(packed[:, :knn], jnp.float32)  # (bs, knn)
    indices = packed[:, knn:]                                        # (bs, knn)

    # Sparse EmbeddingBag(mode='sum', per_sample_weights): gather only the knn
    # selected value rows, then weighted-sum (codebook never enters VMEM).
    gathered = jnp.take(values, indices.reshape(-1), axis=0).reshape(bs, knn, v_dim)
    out = jnp.einsum('bk,bkv->bv', scores, gathered)
    return out.reshape(prefix_shape + (v_dim,))


# ----------------------------------------------------------------------------
# Pure-JAX reference (mirrors the PyTorch module) for a sanity check
# ----------------------------------------------------------------------------
def lopkm_reference(x, params, *, k_dim, n_keys, heads, knn):
    D = x.shape[-1]
    x2 = x.reshape(-1, D).astype(jnp.float32)
    bs = x2.shape[0]
    half = k_dim // 2
    hc, W, b = params['head_center'], params['W'], params['bias']
    keys, values = params['keys'], params['values']
    dist_w = params['dist_w'][0]
    head_dist = jnp.sum((x2[:, None, :] - hc[None, :, :]) ** 2, axis=2)
    head_index = jnp.argmin(head_dist, axis=1)
    res = x2 - hc[head_index]
    q = jnp.einsum('bd,bkd->bk', res, W[head_index],
                   precision=lax.Precision.HIGHEST) + b[head_index]
    q1, q2 = q[:, :half], q[:, half:]
    k1, k2 = keys[head_index, 0], keys[head_index, 1]
    d1 = jnp.sum((q1[:, None, :] - k1) ** 2, axis=2) / k_dim
    d2 = jnp.sum((q2[:, None, :] - k2) ** 2, axis=2) / k_dim
    s1, i1 = lax.top_k(-d1, knn)
    s2, i2 = lax.top_k(-d2, knn)
    all_s = (s1[:, :, None] + s2[:, None, :]).reshape(bs, knn * knn)
    all_i = (i1[:, :, None] * n_keys + i2[:, None, :]).reshape(bs, knn * knn)
    ts, bp = lax.top_k(all_s, knn)
    ti = jnp.take_along_axis(all_i, bp, axis=1)
    sc = -jnp.sqrt(-ts) * dist_w[head_index][:, None]
    p = jax.nn.softmax(sc, axis=1)
    gi = ti + head_index[:, None] * (n_keys ** 2)
    out = jnp.einsum('bk,bkv->bv', p, values[gi],
                     precision=lax.Precision.HIGHEST)
    return out.reshape(x.shape[:-1] + (values.shape[1],))


if __name__ == "__main__":
    input_dim = 32
    output_dim = 32      # v_dim
    k_dim = 16
    n_keys = 16
    heads = 2
    knn = 4
    batch, seq = 2, 8    # flattened bs = 16 -> 2 parallel row tiles

    root = jax.random.PRNGKey(0)
    pkey, xkey = jax.random.split(root)
    params = make_params(pkey, input_dim=input_dim, v_dim=output_dim,
                         k_dim=k_dim, n_keys=n_keys, heads=heads)
    x = jax.random.normal(xkey, (batch, seq, input_dim), jnp.float32)

    shape_kw = dict(k_dim=k_dim, n_keys=n_keys, heads=heads, knn=knn)
    prep_kw = dict(k_dim=k_dim, n_keys=n_keys, heads=heads)
    ref = lopkm_reference(x, params, **shape_kw)

    fwd = jax.jit(partial(lopkm_forward, **shape_kw))

    # f32 MXU operands: close to the reference module numerics.
    ops_f32 = prepare_lopkm_operands(params, param_dtype=jnp.float32, **prep_kw)
    out_f32 = jax.block_until_ready(fwd(x, ops_f32, params['values']))
    assert out_f32.shape == (batch, seq, output_dim), out_f32.shape
    assert bool(jnp.all(jnp.isfinite(out_f32)))
    d32 = jnp.abs(out_f32 - ref)
    assert float(jnp.mean(d32)) < 2.5e-2 and float(jnp.max(d32)) < 0.3, (
        float(jnp.mean(d32)), float(jnp.max(d32)))

    # bf16 MXU operands (default / production path): reduced-precision inputs,
    # f32 accumulation -> looser sanity bound.
    ops_bf16 = prepare_lopkm_operands(params, **prep_kw)
    out_bf16 = jax.block_until_ready(fwd(x, ops_bf16, params['values']))
    assert out_bf16.shape == (batch, seq, output_dim)
    assert bool(jnp.all(jnp.isfinite(out_bf16)))
    assert float(jnp.mean(jnp.abs(out_bf16 - ref))) < 4e-2

    print("KERNEL_OK")
</pallas_src>

<mosaic_0001>
module attributes {stable_mosaic.version = 11 : i64} {
  func.func @lopkm_kernel(%arg0: i32, %arg1: memref<8x32xf32, #tpu.memory_space<vmem>>, %arg2: memref<32x34xf32, #tpu.memory_space<vmem>>, %arg3: memref<1x34xf32, #tpu.memory_space<vmem>>, %arg4: memref<8x32xf32, #tpu.memory_space<vmem>>, %arg5: memref<8x32xf32, #tpu.memory_space<vmem>>, %arg6: memref<2x33xf32, #tpu.memory_space<vmem>>, %arg7: memref<8x8xi32, #tpu.memory_space<vmem>>) attributes {dimension_semantics = [#tpu.dimension_semantics<parallel>], iteration_bounds = array<i64: 2>, scalar_prefetch = 0 : i64, scratch_operands = 0 : i64, tpu.core_type = #tpu.core_type<tc>, window_params = [{transform_indices = @transform_0, window_bounds = array<i64: 8, 32>}, {pipeline_mode = #tpu.pipeline_mode<synchronous>, transform_indices = @transform_1, window_bounds = array<i64: 32, 34>}, {pipeline_mode = #tpu.pipeline_mode<synchronous>, transform_indices = @transform_2, window_bounds = array<i64: 1, 34>}, {pipeline_mode = #tpu.pipeline_mode<synchronous>, transform_indices = @transform_3, window_bounds = array<i64: 8, 32>}, {pipeline_mode = #tpu.pipeline_mode<synchronous>, transform_indices = @transform_4, window_bounds = array<i64: 8, 32>}, {pipeline_mode = #tpu.pipeline_mode<synchronous>, transform_indices = @transform_5, window_bounds = array<i64: 2, 33>}, {transform_indices = @transform_6, window_bounds = array<i64: 8, 8>}]} {
    %c0 = arith.constant 0 : index
    %c0_0 = arith.constant 0 : index
    %0 = vector.load %arg1[%c0, %c0_0] : memref<8x32xf32, #tpu.memory_space<vmem>>, vector<8x32xf32>
    %c0_1 = arith.constant 0 : index
    %c0_2 = arith.constant 0 : index
    %1 = vector.load %arg2[%c0_1, %c0_2] : memref<32x34xf32, #tpu.memory_space<vmem>>, vector<32x34xf32>
    %cst = arith.constant dense<0.000000e+00> : vector<8x34xf32>
    %2 = tpu.matmul %0, %1, %cst {dimension_numbers = #tpu.dot_dimension_numbers<[1], [0], [0], [1], [0, 0, 1, 1], [], []>} : vector<8x32xf32>, vector<32x34xf32>, vector<8x34xf32> -> vector<8x34xf32>
    %c0_3 = arith.constant 0 : index
    %c0_4 = arith.constant 0 : index
    %3 = vector.load %arg3[%c0_3, %c0_4] : memref<1x34xf32, #tpu.memory_space<vmem>>, vector<1x34xf32>
    %4 = vector.broadcast %3 : vector<1x34xf32> to vector<8x34xf32>
    %5 = arith.addf %2, %4 : vector<8x34xf32>
    %6 = vector.extract_strided_slice %5 {offsets = [0, 0], sizes = [8, 32], strides = [1, 1]} : vector<8x34xf32> to vector<8x32xf32>
    %7 = vector.extract_strided_slice %5 {offsets = [0, 32], sizes = [8, 2], strides = [1, 1]} : vector<8x34xf32> to vector<8x2xf32>
    %8 = tpu.iota {dimensions = array<i32: 1>} : vector<8x2xi32>
    %cst_5 = arith.constant dense<0x7F800000> : vector<8xf32>
    %9 = vector.multi_reduction <minimumf>, %7, %cst_5 [1] : vector<8x2xf32> to vector<8xf32>
    %10 = vector.shape_cast %9 : vector<8xf32> to vector<8x1xf32>
    %11 = vector.broadcast %10 : vector<8x1xf32> to vector<8x2xf32>
    %12 = arith.cmpf oeq, %7, %11 : vector<8x2xf32>
    %c2_i32 = arith.constant 2 : i32
    %13 = vector.broadcast %c2_i32 : i32 to vector<8x2xi32>
    %14 = arith.select %12, %8, %13 : vector<8x2xi1>, vector<8x2xi32>
    %cst_6 = arith.constant dense<2147483647> : vector<8xi32>
    %15 = vector.multi_reduction <minsi>, %14, %cst_6 [1] : vector<8x2xi32> to vector<8xi32>
    %16 = vector.shape_cast %15 : vector<8xi32> to vector<8x1xi32>
    %17 = vector.broadcast %16 : vector<8x1xi32> to vector<8x2xi32>
    %18 = arith.cmpi eq, %17, %8 : vector<8x2xi32>
    %19 = arith.extui %18 : vector<8x2xi1> to vector<8x2xi32>
    %20 = arith.sitofp %19 : vector<8x2xi32> to vector<8x2xf32>
    %c0_7 = arith.constant 0 : index
    %c0_8 = arith.constant 0 : index
    %21 = vector.load %arg6[%c0_7, %c0_8] : memref<2x33xf32, #tpu.memory_space<vmem>>, vector<2x33xf32>
    %cst_9 = arith.constant dense<0.000000e+00> : vector<8x33xf32>
    %22 = tpu.matmul %20, %21, %cst_9 {dimension_numbers = #tpu.dot_dimension_numbers<[1], [0], [0], [1], [0, 0, 1, 1], [], []>} : vector<8x2xf32>, vector<2x33xf32>, vector<8x33xf32> -> vector<8x33xf32>
    %23 = vector.extract_strided_slice %22 {offsets = [0, 0], sizes = [8, 16], strides = [1, 1]} : vector<8x33xf32> to vector<8x16xf32>
    %24 = vector.extract_strided_slice %22 {offsets = [0, 16], sizes = [8, 16], strides = [1, 1]} : vector<8x33xf32> to vector<8x16xf32>
    %25 = vector.extract_strided_slice %22 {offsets = [0, 32], sizes = [8, 1], strides = [1, 1]} : vector<8x33xf32> to vector<8x1xf32>
    %cst_10 = arith.constant 0.000000e+00 : f32
    %26 = vector.broadcast %cst_10 : f32 to vector<8x16xf32>
    %cst_11 = arith.constant 0.000000e+00 : f32
    %27 = vector.broadcast %cst_11 : f32 to vector<8x16xf32>
    %cst_12 = arith.constant 0.000000e+00 : f32
    %28 = vector.broadcast %cst_12 : f32 to vector<8x8xf32>
    %cst_13 = arith.constant 0.000000e+00 : f32
    %29 = vector.broadcast %cst_13 : f32 to vector<8x8xf32>
    %c0_i32 = arith.constant 0 : i32
    %30 = vector.broadcast %c0_i32 : i32 to vector<8x1xi32>
    %31 = arith.cmpi eq, %16, %30 : vector<8x1xi32>
    %32 = vector.extract_strided_slice %6 {offsets = [0, 0], sizes = [8, 16], strides = [1, 1]} : vector<8x32xf32> to vector<8x16xf32>
    %33 = vector.extract_strided_slice %32 {offsets = [0, 0], sizes = [8, 8], strides = [1, 1]} : vector<8x16xf32> to vector<8x8xf32>
    %cst_14 = arith.constant 0.000000e+00 : f32
    %34 = vector.shape_cast %31 : vector<8x1xi1> to vector<8x1xi1>
    %35 = vector.broadcast %34 : vector<8x1xi1> to vector<8x8xi1>
    %36 = vector.broadcast %cst_14 : f32 to vector<8x8xf32>
    %37 = arith.select %35, %33, %36 : vector<8x8xi1>, vector<8x8xf32>
    %38 = vector.extract_strided_slice %32 {offsets = [0, 8], sizes = [8, 8], strides = [1, 1]} : vector<8x16xf32> to vector<8x8xf32>
    %cst_15 = arith.constant 0.000000e+00 : f32
    %39 = vector.shape_cast %31 : vector<8x1xi1> to vector<8x1xi1>
    %40 = vector.broadcast %39 : vector<8x1xi1> to vector<8x8xi1>
    %41 = vector.broadcast %cst_15 : f32 to vector<8x8xf32>
    %42 = arith.select %40, %38, %41 : vector<8x8xi1>, vector<8x8xf32>
    %43 = arith.addf %28, %37 : vector<8x8xf32>
    %44 = arith.addf %29, %42 : vector<8x8xf32>
    %c0_16 = arith.constant 0 : index
    %c0_17 = arith.constant 0 : index
    %45 = vector.load %arg4[%c0_16, %c0_17] : memref<8x32xf32, #tpu.memory_space<vmem>>, vector<8x16xf32>
    %cst_18 = arith.constant dense<0.000000e+00> : vector<8x16xf32>
    %46 = tpu.matmul %37, %45, %cst_18 {dimension_numbers = #tpu.dot_dimension_numbers<[1], [0], [0], [1], [0, 0, 1, 1], [], []>} : vector<8x8xf32>, vector<8x16xf32>, vector<8x16xf32> -> vector<8x16xf32>
    %47 = arith.addf %26, %46 : vector<8x16xf32>
    %c0_19 = arith.constant 0 : index
    %c0_20 = arith.constant 0 : index
    %48 = vector.load %arg5[%c0_19, %c0_20] : memref<8x32xf32, #tpu.memory_space<vmem>>, vector<8x16xf32>
    %cst_21 = arith.constant dense<0.000000e+00> : vector<8x16xf32>
    %49 = tpu.matmul %42, %48, %cst_21 {dimension_numbers = #tpu.dot_dimension_numbers<[1], [0], [0], [1], [0, 0, 1, 1], [], []>} : vector<8x8xf32>, vector<8x16xf32>, vector<8x16xf32> -> vector<8x16xf32>
    %50 = arith.addf %27, %49 : vector<8x16xf32>
    %c1_i32 = arith.constant 1 : i32
    %51 = vector.broadcast %c1_i32 : i32 to vector<8x1xi32>
    %52 = arith.cmpi eq, %16, %51 : vector<8x1xi32>
    %53 = vector.extract_strided_slice %6 {offsets = [0, 16], sizes = [8, 16], strides = [1, 1]} : vector<8x32xf32> to vector<8x16xf32>
    %54 = vector.extract_strided_slice %53 {offsets = [0, 0], sizes = [8, 8], strides = [1, 1]} : vector<8x16xf32> to vector<8x8xf32>
    %cst_22 = arith.constant 0.000000e+00 : f32
    %55 = vector.shape_cast %52 : vector<8x1xi1> to vector<8x1xi1>
    %56 = vector.broadcast %55 : vector<8x1xi1> to vector<8x8xi1>
    %57 = vector.broadcast %cst_22 : f32 to vector<8x8xf32>
    %58 = arith.select %56, %54, %57 : vector<8x8xi1>, vector<8x8xf32>
    %59 = vector.extract_strided_slice %53 {offsets = [0, 8], sizes = [8, 8], strides = [1, 1]} : vector<8x16xf32> to vector<8x8xf32>
    %cst_23 = arith.constant 0.000000e+00 : f32
    %60 = vector.shape_cast %52 : vector<8x1xi1> to vector<8x1xi1>
    %61 = vector.broadcast %60 : vector<8x1xi1> to vector<8x8xi1>
    %62 = vector.broadcast %cst_23 : f32 to vector<8x8xf32>
    %63 = arith.select %61, %59, %62 : vector<8x8xi1>, vector<8x8xf32>
    %64 = arith.addf %43, %58 : vector<8x8xf32>
    %65 = arith.addf %44, %63 : vector<8x8xf32>
    %c0_24 = arith.constant 0 : index
    %c16 = arith.constant 16 : index
    %66 = vector.load %arg4[%c0_24, %c16] : memref<8x32xf32, #tpu.memory_space<vmem>>, vector<8x16xf32>
    %cst_25 = arith.constant dense<0.000000e+00> : vector<8x16xf32>
    %67 = tpu.matmul %58, %66, %cst_25 {dimension_numbers = #tpu.dot_dimension_numbers<[1], [0], [0], [1], [0, 0, 1, 1], [], []>} : vector<8x8xf32>, vector<8x16xf32>, vector<8x16xf32> -> vector<8x16xf32>
    %68 = arith.addf %47, %67 : vector<8x16xf32>
    %c0_26 = arith.constant 0 : index
    %c16_27 = arith.constant 16 : index
    %69 = vector.load %arg5[%c0_26, %c16_27] : memref<8x32xf32, #tpu.memory_space<vmem>>, vector<8x16xf32>
    %cst_28 = arith.constant dense<0.000000e+00> : vector<8x16xf32>
    %70 = tpu.matmul %63, %69, %cst_28 {dimension_numbers = #tpu.dot_dimension_numbers<[1], [0], [0], [1], [0, 0, 1, 1], [], []>} : vector<8x8xf32>, vector<8x16xf32>, vector<8x16xf32> -> vector<8x16xf32>
    %71 = arith.addf %50, %70 : vector<8x16xf32>
    %72 = arith.mulf %64, %64 : vector<8x8xf32>
    %cst_29 = arith.constant dense<0.000000e+00> : vector<8xf32>
    %73 = vector.multi_reduction <add>, %72, %cst_29 [1] : vector<8x8xf32> to vector<8xf32>
    %74 = vector.shape_cast %73 : vector<8xf32> to vector<8x1xf32>
    %75 = arith.mulf %65, %65 : vector<8x8xf32>
    %cst_30 = arith.constant dense<0.000000e+00> : vector<8xf32>
    %76 = vector.multi_reduction <add>, %75, %cst_30 [1] : vector<8x8xf32> to vector<8xf32>
    %77 = vector.shape_cast %76 : vector<8xf32> to vector<8x1xf32>
    %78 = vector.broadcast %74 : vector<8x1xf32> to vector<8x16xf32>
    %79 = arith.addf %78, %68 : vector<8x16xf32>
    %80 = arith.addf %79, %23 : vector<8x16xf32>
    %cst_31 = arith.constant 0.000000e+00 : f32
    %81 = vector.broadcast %cst_31 : f32 to vector<8x16xf32>
    %82 = arith.maximumf %80, %81 : vector<8x16xf32>
    %cst_32 = arith.constant 6.250000e-02 : f32
    %83 = vector.broadcast %cst_32 : f32 to vector<8x16xf32>
    %84 = arith.mulf %82, %83 : vector<8x16xf32>
    %85 = vector.broadcast %77 : vector<8x1xf32> to vector<8x16xf32>
    %86 = arith.addf %85, %71 : vector<8x16xf32>
    %87 = arith.addf %86, %24 : vector<8x16xf32>
    %cst_33 = arith.constant 0.000000e+00 : f32
    %88 = vector.broadcast %cst_33 : f32 to vector<8x16xf32>
    %89 = arith.maximumf %87, %88 : vector<8x16xf32>
    %cst_34 = arith.constant 6.250000e-02 : f32
    %90 = vector.broadcast %cst_34 : f32 to vector<8x16xf32>
    %91 = arith.mulf %89, %90 : vector<8x16xf32>
    %92 = tpu.iota {dimensions = array<i32: 1>} : vector<8x4xi32>
    %93 = tpu.iota {dimensions = array<i32: 1>} : vector<8x16xi32>
    %94 = tpu.bitcast %84 : vector<8x16xf32> -> vector<8x16xi32>
    %c-16_i32 = arith.constant -16 : i32
    %95 = vector.broadcast %c-16_i32 : i32 to vector<8x16xi32>
    %96 = arith.andi %94, %95 : vector<8x16xi32>
    %97 = arith.ori %96, %93 : vector<8x16xi32>
    %cst_35 = arith.constant 0.000000e+00 : f32
    %98 = vector.broadcast %cst_35 : f32 to vector<8x4xf32>
    %c0_i32_36 = arith.constant 0 : i32
    %99 = vector.broadcast %c0_i32_36 : i32 to vector<8x4xi32>
    %c-16_i32_37 = arith.constant -16 : i32
    %c15_i32 = arith.constant 15 : i32
    %c2147483647_i32 = arith.constant 2147483647 : i32
    %c0_i32_38 = arith.constant 0 : i32
    %cst_39 = arith.constant dense<2147483647> : vector<8xi32>
    %100 = vector.multi_reduction <minsi>, %97, %cst_39 [1] : vector<8x16xi32> to vector<8xi32>
    %101 = vector.shape_cast %100 : vector<8xi32> to vector<8x1xi32>
    %102 = vector.broadcast %c0_i32_38 : i32 to vector<8x4xi32>
    %103 = arith.cmpi eq, %92, %102 : vector<8x4xi32>
    %104 = vector.broadcast %c-16_i32_37 : i32 to vector<8x1xi32>
    %105 = arith.andi %101, %104 : vector<8x1xi32>
    %106 = tpu.bitcast %105 : vector<8x1xi32> -> vector<8x1xf32>
    %107 = vector.shape_cast %106 : vector<8x1xf32> to vector<8x1xf32>
    %108 = vector.broadcast %107 : vector<8x1xf32> to vector<8x4xf32>
    %109 = arith.select %103, %108, %98 : vector<8x4xi1>, vector<8x4xf32>
    %110 = vector.broadcast %c15_i32 : i32 to vector<8x1xi32>
    %111 = arith.andi %101, %110 : vector<8x1xi32>
    %112 = vector.shape_cast %111 : vector<8x1xi32> to vector<8x1xi32>
    %113 = vector.broadcast %112 : vector<8x1xi32> to vector<8x4xi32>
    %114 = arith.select %103, %113, %99 : vector<8x4xi1>, vector<8x4xi32>
    %115 = vector.broadcast %101 : vector<8x1xi32> to vector<8x16xi32>
    %116 = arith.cmpi eq, %97, %115 : vector<8x16xi32>
    %117 = vector.broadcast %c2147483647_i32 : i32 to vector<8x16xi32>
    %118 = arith.select %116, %117, %97 : vector<8x16xi1>, vector<8x16xi32>
    %c1_i32_40 = arith.constant 1 : i32
    %cst_41 = arith.constant dense<2147483647> : vector<8xi32>
    %119 = vector.multi_reduction <minsi>, %118, %cst_41 [1] : vector<8x16xi32> to vector<8xi32>
    %120 = vector.shape_cast %119 : vector<8xi32> to vector<8x1xi32>
    %121 = vector.broadcast %c1_i32_40 : i32 to vector<8x4xi32>
    %122 = arith.cmpi eq, %92, %121 : vector<8x4xi32>
    %123 = vector.broadcast %c-16_i32_37 : i32 to vector<8x1xi32>
    %124 = arith.andi %120, %123 : vector<8x1xi32>
    %125 = tpu.bitcast %124 : vector<8x1xi32> -> vector<8x1xf32>
    %126 = vector.shape_cast %125 : vector<8x1xf32> to vector<8x1xf32>
    %127 = vector.broadcast %126 : vector<8x1xf32> to vector<8x4xf32>
    %128 = arith.select %122, %127, %109 : vector<8x4xi1>, vector<8x4xf32>
    %129 = vector.broadcast %c15_i32 : i32 to vector<8x1xi32>
    %130 = arith.andi %120, %129 : vector<8x1xi32>
    %131 = vector.shape_cast %130 : vector<8x1xi32> to vector<8x1xi32>
    %132 = vector.broadcast %131 : vector<8x1xi32> to vector<8x4xi32>
    %133 = arith.select %122, %132, %114 : vector<8x4xi1>, vector<8x4xi32>
    %134 = vector.broadcast %120 : vector<8x1xi32> to vector<8x16xi32>
    %135 = arith.cmpi eq, %118, %134 : vector<8x16xi32>
    %136 = vector.broadcast %c2147483647_i32 : i32 to vector<8x16xi32>
    %137 = arith.select %135, %136, %118 : vector<8x16xi1>, vector<8x16xi32>
    %c2_i32_42 = arith.constant 2 : i32
    %cst_43 = arith.constant dense<2147483647> : vector<8xi32>
    %138 = vector.multi_reduction <minsi>, %137, %cst_43 [1] : vector<8x16xi32> to vector<8xi32>
    %139 = vector.shape_cast %138 : vector<8xi32> to vector<8x1xi32>
    %140 = vector.broadcast %c2_i32_42 : i32 to vector<8x4xi32>
    %141 = arith.cmpi eq, %92, %140 : vector<8x4xi32>
    %142 = vector.broadcast %c-16_i32_37 : i32 to vector<8x1xi32>
    %143 = arith.andi %139, %142 : vector<8x1xi32>
    %144 = tpu.bitcast %143 : vector<8x1xi32> -> vector<8x1xf32>
    %145 = vector.shape_cast %144 : vector<8x1xf32> to vector<8x1xf32>
    %146 = vector.broadcast %145 : vector<8x1xf32> to vector<8x4xf32>
    %147 = arith.select %141, %146, %128 : vector<8x4xi1>, vector<8x4xf32>
    %148 = vector.broadcast %c15_i32 : i32 to vector<8x1xi32>
    %149 = arith.andi %139, %148 : vector<8x1xi32>
    %150 = vector.shape_cast %149 : vector<8x1xi32> to vector<8x1xi32>
    %151 = vector.broadcast %150 : vector<8x1xi32> to vector<8x4xi32>
    %152 = arith.select %141, %151, %133 : vector<8x4xi1>, vector<8x4xi32>
    %153 = vector.broadcast %139 : vector<8x1xi32> to vector<8x16xi32>
    %154 = arith.cmpi eq, %137, %153 : vector<8x16xi32>
    %155 = vector.broadcast %c2147483647_i32 : i32 to vector<8x16xi32>
    %156 = arith.select %154, %155, %137 : vector<8x16xi1>, vector<8x16xi32>
    %c3_i32 = arith.constant 3 : i32
    %cst_44 = arith.constant dense<2147483647> : vector<8xi32>
    %157 = vector.multi_reduction <minsi>, %156, %cst_44 [1] : vector<8x16xi32> to vector<8xi32>
    %158 = vector.shape_cast %157 : vector<8xi32> to vector<8x1xi32>
    %159 = vector.broadcast %c3_i32 : i32 to vector<8x4xi32>
    %160 = arith.cmpi eq, %92, %159 : vector<8x4xi32>
    %161 = vector.broadcast %c-16_i32_37 : i32 to vector<8x1xi32>
    %162 = arith.andi %158, %161 : vector<8x1xi32>
    %163 = tpu.bitcast %162 : vector<8x1xi32> -> vector<8x1xf32>
    %164 = vector.shape_cast %163 : vector<8x1xf32> to vector<8x1xf32>
    %165 = vector.broadcast %164 : vector<8x1xf32> to vector<8x4xf32>
    %166 = arith.select %160, %165, %147 : vector<8x4xi1>, vector<8x4xf32>
    %167 = vector.broadcast %c15_i32 : i32 to vector<8x1xi32>
    %168 = arith.andi %158, %167 : vector<8x1xi32>
    %169 = vector.shape_cast %168 : vector<8x1xi32> to vector<8x1xi32>
    %170 = vector.broadcast %169 : vector<8x1xi32> to vector<8x4xi32>
    %171 = arith.select %160, %170, %152 : vector<8x4xi1>, vector<8x4xi32>
    %172 = vector.broadcast %158 : vector<8x1xi32> to vector<8x16xi32>
    %173 = arith.cmpi eq, %156, %172 : vector<8x16xi32>
    %174 = vector.broadcast %c2147483647_i32 : i32 to vector<8x16xi32>
    %175 = arith.select %173, %174, %156 : vector<8x16xi1>, vector<8x16xi32>
    %c4_i32 = arith.constant 4 : i32
    %176 = tpu.iota {dimensions = array<i32: 1>} : vector<8x16xi32>
    %177 = tpu.bitcast %91 : vector<8x16xf32> -> vector<8x16xi32>
    %c-16_i32_45 = arith.constant -16 : i32
    %178 = vector.broadcast %c-16_i32_45 : i32 to vector<8x16xi32>
    %179 = arith.andi %177, %178 : vector<8x16xi32>
    %180 = arith.ori %179, %176 : vector<8x16xi32>
    %cst_46 = arith.constant 0.000000e+00 : f32
    %181 = vector.broadcast %cst_46 : f32 to vector<8x4xf32>
    %c0_i32_47 = arith.constant 0 : i32
    %182 = vector.broadcast %c0_i32_47 : i32 to vector<8x4xi32>
    %c-16_i32_48 = arith.constant -16 : i32
    %c15_i32_49 = arith.constant 15 : i32
    %c2147483647_i32_50 = arith.constant 2147483647 : i32
    %c0_i32_51 = arith.constant 0 : i32
    %cst_52 = arith.constant dense<2147483647> : vector<8xi32>
    %183 = vector.multi_reduction <minsi>, %180, %cst_52 [1] : vector<8x16xi32> to vector<8xi32>
    %184 = vector.shape_cast %183 : vector<8xi32> to vector<8x1xi32>
    %185 = vector.broadcast %c0_i32_51 : i32 to vector<8x4xi32>
    %186 = arith.cmpi eq, %92, %185 : vector<8x4xi32>
    %187 = vector.broadcast %c-16_i32_48 : i32 to vector<8x1xi32>
    %188 = arith.andi %184, %187 : vector<8x1xi32>
    %189 = tpu.bitcast %188 : vector<8x1xi32> -> vector<8x1xf32>
    %190 = vector.shape_cast %189 : vector<8x1xf32> to vector<8x1xf32>
    %191 = vector.broadcast %190 : vector<8x1xf32> to vector<8x4xf32>
    %192 = arith.select %186, %191, %181 : vector<8x4xi1>, vector<8x4xf32>
    %193 = vector.broadcast %c15_i32_49 : i32 to vector<8x1xi32>
    %194 = arith.andi %184, %193 : vector<8x1xi32>
    %195 = vector.shape_cast %194 : vector<8x1xi32> to vector<8x1xi32>
    %196 = vector.broadcast %195 : vector<8x1xi32> to vector<8x4xi32>
    %197 = arith.select %186, %196, %182 : vector<8x4xi1>, vector<8x4xi32>
    %198 = vector.broadcast %184 : vector<8x1xi32> to vector<8x16xi32>
    %199 = arith.cmpi eq, %180, %198 : vector<8x16xi32>
    %200 = vector.broadcast %c2147483647_i32_50 : i32 to vector<8x16xi32>
    %201 = arith.select %199, %200, %180 : vector<8x16xi1>, vector<8x16xi32>
    %c1_i32_53 = arith.constant 1 : i32
    %cst_54 = arith.constant dense<2147483647> : vector<8xi32>
    %202 = vector.multi_reduction <minsi>, %201, %cst_54 [1] : vector<8x16xi32> to vector<8xi32>
    %203 = vector.shape_cast %202 : vector<8xi32> to vector<8x1xi32>
    %204 = vector.broadcast %c1_i32_53 : i32 to vector<8x4xi32>
    %205 = arith.cmpi eq, %92, %204 : vector<8x4xi32>
    %206 = vector.broadcast %c-16_i32_48 : i32 to vector<8x1xi32>
    %207 = arith.andi %203, %206 : vector<8x1xi32>
    %208 = tpu.bitcast %207 : vector<8x1xi32> -> vector<8x1xf32>
    %209 = vector.shape_cast %208 : vector<8x1xf32> to vector<8x1xf32>
    %210 = vector.broadcast %209 : vector<8x1xf32> to vector<8x4xf32>
    %211 = arith.select %205, %210, %192 : vector<8x4xi1>, vector<8x4xf32>
    %212 = vector.broadcast %c15_i32_49 : i32 to vector<8x1xi32>
    %213 = arith.andi %203, %212 : vector<8x1xi32>
    %214 = vector.shape_cast %213 : vector<8x1xi32> to vector<8x1xi32>
    %215 = vector.broadcast %214 : vector<8x1xi32> to vector<8x4xi32>
    %216 = arith.select %205, %215, %197 : vector<8x4xi1>, vector<8x4xi32>
    %217 = vector.broadcast %203 : vector<8x1xi32> to vector<8x16xi32>
    %218 = arith.cmpi eq, %201, %217 : vector<8x16xi32>
    %219 = vector.broadcast %c2147483647_i32_50 : i32 to vector<8x16xi32>
    %220 = arith.select %218, %219, %201 : vector<8x16xi1>, vector<8x16xi32>
    %c2_i32_55 = arith.constant 2 : i32
    %cst_56 = arith.constant dense<2147483647> : vector<8xi32>
    %221 = vector.multi_reduction <minsi>, %220, %cst_56 [1] : vector<8x16xi32> to vector<8xi32>
    %222 = vector.shape_cast %221 : vector<8xi32> to vector<8x1xi32>
    %223 = vector.broadcast %c2_i32_55 : i32 to vector<8x4xi32>
    %224 = arith.cmpi eq, %92, %223 : vector<8x4xi32>
    %225 = vector.broadcast %c-16_i32_48 : i32 to vector<8x1xi32>
    %226 = arith.andi %222, %225 : vector<8x1xi32>
    %227 = tpu.bitcast %226 : vector<8x1xi32> -> vector<8x1xf32>
    %228 = vector.shape_cast %227 : vector<8x1xf32> to vector<8x1xf32>
    %229 = vector.broadcast %228 : vector<8x1xf32> to vector<8x4xf32>
    %230 = arith.select %224, %229, %211 : vector<8x4xi1>, vector<8x4xf32>
    %231 = vector.broadcast %c15_i32_49 : i32 to vector<8x1xi32>
    %232 = arith.andi %222, %231 : vector<8x1xi32>
    %233 = vector.shape_cast %232 : vector<8x1xi32> to vector<8x1xi32>
    %234 = vector.broadcast %233 : vector<8x1xi32> to vector<8x4xi32>
    %235 = arith.select %224, %234, %216 : vector<8x4xi1>, vector<8x4xi32>
    %236 = vector.broadcast %222 : vector<8x1xi32> to vector<8x16xi32>
    %237 = arith.cmpi eq, %220, %236 : vector<8x16xi32>
    %238 = vector.broadcast %c2147483647_i32_50 : i32 to vector<8x16xi32>
    %239 = arith.select %237, %238, %220 : vector<8x16xi1>, vector<8x16xi32>
    %c3_i32_57 = arith.constant 3 : i32
    %cst_58 = arith.constant dense<2147483647> : vector<8xi32>
    %240 = vector.multi_reduction <minsi>, %239, %cst_58 [1] : vector<8x16xi32> to vector<8xi32>
    %241 = vector.shape_cast %240 : vector<8xi32> to vector<8x1xi32>
    %242 = vector.broadcast %c3_i32_57 : i32 to vector<8x4xi32>
    %243 = arith.cmpi eq, %92, %242 : vector<8x4xi32>
    %244 = vector.broadcast %c-16_i32_48 : i32 to vector<8x1xi32>
    %245 = arith.andi %241, %244 : vector<8x1xi32>
    %246 = tpu.bitcast %245 : vector<8x1xi32> -> vector<8x1xf32>
    %247 = vector.shape_cast %246 : vector<8x1xf32> to vector<8x1xf32>
    %248 = vector.broadcast %247 : vector<8x1xf32> to vector<8x4xf32>
    %249 = arith.select %243, %248, %230 : vector<8x4xi1>, vector<8x4xf32>
    %250 = vector.broadcast %c15_i32_49 : i32 to vector<8x1xi32>
    %251 = arith.andi %241, %250 : vector<8x1xi32>
    %252 = vector.shape_cast %251 : vector<8x1xi32> to vector<8x1xi32>
    %253 = vector.broadcast %252 : vector<8x1xi32> to vector<8x4xi32>
    %254 = arith.select %243, %253, %235 : vector<8x4xi1>, vector<8x4xi32>
    %255 = vector.broadcast %241 : vector<8x1xi32> to vector<8x16xi32>
    %256 = arith.cmpi eq, %239, %255 : vector<8x16xi32>
    %257 = vector.broadcast %c2147483647_i32_50 : i32 to vector<8x16xi32>
    %258 = arith.select %256, %257, %239 : vector<8x16xi1>, vector<8x16xi32>
    %c4_i32_59 = arith.constant 4 : i32
    %259 = vector.shape_cast %166 : vector<8x4xf32> to vector<8x4x1xf32>
    %260 = vector.shape_cast %249 : vector<8x4xf32> to vector<8x1x4xf32>
    %261 = vector.broadcast %259 : vector<8x4x1xf32> to vector<8x4x4xf32>
    %262 = vector.broadcast %260 : vector<8x1x4xf32> to vector<8x4x4xf32>
    %263 = arith.addf %261, %262 : vector<8x4x4xf32>
    %264 = vector.shape_cast %263 : vector<8x4x4xf32> to vector<8x16xf32>
    %265 = vector.shape_cast %171 : vector<8x4xi32> to vector<8x4x1xi32>
    %c16_i32 = arith.constant 16 : i32
    %266 = vector.broadcast %c16_i32 : i32 to vector<8x4x1xi32>
    %267 = arith.muli %265, %266 : vector<8x4x1xi32>
    %268 = vector.shape_cast %254 : vector<8x4xi32> to vector<8x1x4xi32>
    %269 = vector.broadcast %267 : vector<8x4x1xi32> to vector<8x4x4xi32>
    %270 = vector.broadcast %268 : vector<8x1x4xi32> to vector<8x4x4xi32>
    %271 = arith.addi %269, %270 : vector<8x4x4xi32>
    %272 = vector.shape_cast %271 : vector<8x4x4xi32> to vector<8x16xi32>
    %273 = tpu.iota {dimensions = array<i32: 1>} : vector<8x16xi32>
    %274 = tpu.bitcast %264 : vector<8x16xf32> -> vector<8x16xi32>
    %c-16_i32_60 = arith.constant -16 : i32
    %275 = vector.broadcast %c-16_i32_60 : i32 to vector<8x16xi32>
    %276 = arith.andi %274, %275 : vector<8x16xi32>
    %277 = arith.ori %276, %273 : vector<8x16xi32>
    %cst_61 = arith.constant 0.000000e+00 : f32
    %278 = vector.broadcast %cst_61 : f32 to vector<8x4xf32>
    %c0_i32_62 = arith.constant 0 : i32
    %279 = vector.broadcast %c0_i32_62 : i32 to vector<8x4xi32>
    %c-16_i32_63 = arith.constant -16 : i32
    %c2147483647_i32_64 = arith.constant 2147483647 : i32
    %c0_i32_65 = arith.constant 0 : i32
    %cst_66 = arith.constant dense<2147483647> : vector<8xi32>
    %280 = vector.multi_reduction <minsi>, %277, %cst_66 [1] : vector<8x16xi32> to vector<8xi32>
    %281 = vector.shape_cast %280 : vector<8xi32> to vector<8x1xi32>
    %282 = vector.broadcast %281 : vector<8x1xi32> to vector<8x16xi32>
    %283 = arith.cmpi eq, %277, %282 : vector<8x16xi32>
    %c0_i32_67 = arith.constant 0 : i32
    %284 = vector.broadcast %c0_i32_67 : i32 to vector<8x16xi32>
    %285 = arith.select %283, %272, %284 : vector<8x16xi1>, vector<8x16xi32>
    %cst_68 = arith.constant dense<0> : vector<8xi32>
    %286 = vector.multi_reduction <add>, %285, %cst_68 [1] : vector<8x16xi32> to vector<8xi32>
    %287 = vector.shape_cast %286 : vector<8xi32> to vector<8x1xi32>
    %288 = vector.broadcast %c0_i32_65 : i32 to vector<8x4xi32>
    %289 = arith.cmpi eq, %92, %288 : vector<8x4xi32>
    %290 = vector.broadcast %c-16_i32_63 : i32 to vector<8x1xi32>
    %291 = arith.andi %281, %290 : vector<8x1xi32>
    %292 = tpu.bitcast %291 : vector<8x1xi32> -> vector<8x1xf32>
    %293 = vector.shape_cast %292 : vector<8x1xf32> to vector<8x1xf32>
    %294 = vector.broadcast %293 : vector<8x1xf32> to vector<8x4xf32>
    %295 = arith.select %289, %294, %278 : vector<8x4xi1>, vector<8x4xf32>
    %296 = vector.shape_cast %287 : vector<8x1xi32> to vector<8x1xi32>
    %297 = vector.broadcast %296 : vector<8x1xi32> to vector<8x4xi32>
    %298 = arith.select %289, %297, %279 : vector<8x4xi1>, vector<8x4xi32>
    %299 = vector.broadcast %c2147483647_i32_64 : i32 to vector<8x16xi32>
    %300 = arith.select %283, %299, %277 : vector<8x16xi1>, vector<8x16xi32>
    %c1_i32_69 = arith.constant 1 : i32
    %cst_70 = arith.constant dense<2147483647> : vector<8xi32>
    %301 = vector.multi_reduction <minsi>, %300, %cst_70 [1] : vector<8x16xi32> to vector<8xi32>
    %302 = vector.shape_cast %301 : vector<8xi32> to vector<8x1xi32>
    %303 = vector.broadcast %302 : vector<8x1xi32> to vector<8x16xi32>
    %304 = arith.cmpi eq, %300, %303 : vector<8x16xi32>
    %c0_i32_71 = arith.constant 0 : i32
    %305 = vector.broadcast %c0_i32_71 : i32 to vector<8x16xi32>
    %306 = arith.select %304, %272, %305 : vector<8x16xi1>, vector<8x16xi32>
    %cst_72 = arith.constant dense<0> : vector<8xi32>
    %307 = vector.multi_reduction <add>, %306, %cst_72 [1] : vector<8x16xi32> to vector<8xi32>
    %308 = vector.shape_cast %307 : vector<8xi32> to vector<8x1xi32>
    %309 = vector.broadcast %c1_i32_69 : i32 to vector<8x4xi32>
    %310 = arith.cmpi eq, %92, %309 : vector<8x4xi32>
    %311 = vector.broadcast %c-16_i32_63 : i32 to vector<8x1xi32>
    %312 = arith.andi %302, %311 : vector<8x1xi32>
    %313 = tpu.bitcast %312 : vector<8x1xi32> -> vector<8x1xf32>
    %314 = vector.shape_cast %313 : vector<8x1xf32> to vector<8x1xf32>
    %315 = vector.broadcast %314 : vector<8x1xf32> to vector<8x4xf32>
    %316 = arith.select %310, %315, %295 : vector<8x4xi1>, vector<8x4xf32>
    %317 = vector.shape_cast %308 : vector<8x1xi32> to vector<8x1xi32>
    %318 = vector.broadcast %317 : vector<8x1xi32> to vector<8x4xi32>
    %319 = arith.select %310, %318, %298 : vector<8x4xi1>, vector<8x4xi32>
    %320 = vector.broadcast %c2147483647_i32_64 : i32 to vector<8x16xi32>
    %321 = arith.select %304, %320, %300 : vector<8x16xi1>, vector<8x16xi32>
    %c2_i32_73 = arith.constant 2 : i32
    %cst_74 = arith.constant dense<2147483647> : vector<8xi32>
    %322 = vector.multi_reduction <minsi>, %321, %cst_74 [1] : vector<8x16xi32> to vector<8xi32>
    %323 = vector.shape_cast %322 : vector<8xi32> to vector<8x1xi32>
    %324 = vector.broadcast %323 : vector<8x1xi32> to vector<8x16xi32>
    %325 = arith.cmpi eq, %321, %324 : vector<8x16xi32>
    %c0_i32_75 = arith.constant 0 : i32
    %326 = vector.broadcast %c0_i32_75 : i32 to vector<8x16xi32>
    %327 = arith.select %325, %272, %326 : vector<8x16xi1>, vector<8x16xi32>
    %cst_76 = arith.constant dense<0> : vector<8xi32>
    %328 = vector.multi_reduction <add>, %327, %cst_76 [1] : vector<8x16xi32> to vector<8xi32>
    %329 = vector.shape_cast %328 : vector<8xi32> to vector<8x1xi32>
    %330 = vector.broadcast %c2_i32_73 : i32 to vector<8x4xi32>
    %331 = arith.cmpi eq, %92, %330 : vector<8x4xi32>
    %332 = vector.broadcast %c-16_i32_63 : i32 to vector<8x1xi32>
    %333 = arith.andi %323, %332 : vector<8x1xi32>
    %334 = tpu.bitcast %333 : vector<8x1xi32> -> vector<8x1xf32>
    %335 = vector.shape_cast %334 : vector<8x1xf32> to vector<8x1xf32>
    %336 = vector.broadcast %335 : vector<8x1xf32> to vector<8x4xf32>
    %337 = arith.select %331, %336, %316 : vector<8x4xi1>, vector<8x4xf32>
    %338 = vector.shape_cast %329 : vector<8x1xi32> to vector<8x1xi32>
    %339 = vector.broadcast %338 : vector<8x1xi32> to vector<8x4xi32>
    %340 = arith.select %331, %339, %319 : vector<8x4xi1>, vector<8x4xi32>
    %341 = vector.broadcast %c2147483647_i32_64 : i32 to vector<8x16xi32>
    %342 = arith.select %325, %341, %321 : vector<8x16xi1>, vector<8x16xi32>
    %c3_i32_77 = arith.constant 3 : i32
    %cst_78 = arith.constant dense<2147483647> : vector<8xi32>
    %343 = vector.multi_reduction <minsi>, %342, %cst_78 [1] : vector<8x16xi32> to vector<8xi32>
    %344 = vector.shape_cast %343 : vector<8xi32> to vector<8x1xi32>
    %345 = vector.broadcast %344 : vector<8x1xi32> to vector<8x16xi32>
    %346 = arith.cmpi eq, %342, %345 : vector<8x16xi32>
    %c0_i32_79 = arith.constant 0 : i32
    %347 = vector.broadcast %c0_i32_79 : i32 to vector<8x16xi32>
    %348 = arith.select %346, %272, %347 : vector<8x16xi1>, vector<8x16xi32>
    %cst_80 = arith.constant dense<0> : vector<8xi32>
    %349 = vector.multi_reduction <add>, %348, %cst_80 [1] : vector<8x16xi32> to vector<8xi32>
    %350 = vector.shape_cast %349 : vector<8xi32> to vector<8x1xi32>
    %351 = vector.broadcast %c3_i32_77 : i32 to vector<8x4xi32>
    %352 = arith.cmpi eq, %92, %351 : vector<8x4xi32>
    %353 = vector.broadcast %c-16_i32_63 : i32 to vector<8x1xi32>
    %354 = arith.andi %344, %353 : vector<8x1xi32>
    %355 = tpu.bitcast %354 : vector<8x1xi32> -> vector<8x1xf32>
    %356 = vector.shape_cast %355 : vector<8x1xf32> to vector<8x1xf32>
    %357 = vector.broadcast %356 : vector<8x1xf32> to vector<8x4xf32>
    %358 = arith.select %352, %357, %337 : vector<8x4xi1>, vector<8x4xf32>
    %359 = vector.shape_cast %350 : vector<8x1xi32> to vector<8x1xi32>
    %360 = vector.broadcast %359 : vector<8x1xi32> to vector<8x4xi32>
    %361 = arith.select %352, %360, %340 : vector<8x4xi1>, vector<8x4xi32>
    %362 = vector.broadcast %c2147483647_i32_64 : i32 to vector<8x16xi32>
    %363 = arith.select %346, %362, %342 : vector<8x16xi1>, vector<8x16xi32>
    %c4_i32_81 = arith.constant 4 : i32
    %364 = math.sqrt %358 : vector<8x4xf32>
    %cst_82 = arith.constant 0.000000e+00 : f32
    %365 = vector.broadcast %cst_82 : f32 to vector<8x4xf32>
    %366 = arith.subf %365, %364 : vector<8x4xf32>
    %367 = vector.broadcast %25 : vector<8x1xf32> to vector<8x4xf32>
    %368 = arith.mulf %366, %367 : vector<8x4xf32>
    %cst_83 = arith.constant dense<0xFF800000> : vector<8xf32>
    %369 = vector.multi_reduction <maximumf>, %368, %cst_83 [1] : vector<8x4xf32> to vector<8xf32>
    %370 = vector.shape_cast %369 : vector<8xf32> to vector<8x1xf32>
    %371 = vector.broadcast %370 : vector<8x1xf32> to vector<8x4xf32>
    %372 = arith.subf %368, %371 : vector<8x4xf32>
    %373 = math.exp %372 : vector<8x4xf32>
    %cst_84 = arith.constant dense<0.000000e+00> : vector<8xf32>
    %374 = vector.multi_reduction <add>, %373, %cst_84 [1] : vector<8x4xf32> to vector<8xf32>
    %375 = vector.shape_cast %374 : vector<8xf32> to vector<8x1xf32>
    %376 = tpu.reciprocal %375 {approx = true} : vector<8x1xf32> -> vector<8x1xf32>
    %377 = vector.broadcast %376 : vector<8x1xf32> to vector<8x4xf32>
    %378 = arith.mulf %373, %377 : vector<8x4xf32>
    %c256_i32 = arith.constant 256 : i32
    %379 = vector.broadcast %c256_i32 : i32 to vector<8x1xi32>
    %380 = arith.muli %16, %379 : vector<8x1xi32>
    %381 = vector.broadcast %380 : vector<8x1xi32> to vector<8x4xi32>
    %382 = arith.addi %361, %381 : vector<8x4xi32>
    %383 = tpu.bitcast %378 : vector<8x4xf32> -> vector<8x4xi32>
    %384 = tpu.concatenate %383, %382 in 1 : vector<8x4xi32>, vector<8x4xi32> -> vector<8x8xi32>
    %c0_85 = arith.constant 0 : index
    %c0_86 = arith.constant 0 : index
    %385 = vector.load %arg7[%c0_85, %c0_86] : memref<8x8xi32, #tpu.memory_space<vmem>>, vector<8x8xi32>
    tpu.vector_store %arg7[%c0_85, %c0_86], %384 {strides = array<i32>} : memref<8x8xi32, #tpu.memory_space<vmem>>, vector<8x8xi32>,
    return
  }
  func.func @transform_0(%arg0: i32) -> (i32, i32) {
    %c0_i32 = arith.constant 0 : i32
    %c0_i32_0 = arith.constant 0 : i32
    return %arg0, %c0_i32 : i32, i32
  }
  func.func @transform_1(%arg0: i32) -> (i32, i32) {
    %c0_i32 = arith.constant 0 : i32
    %c0_i32_0 = arith.constant 0 : i32
    %c0_i32_1 = arith.constant 0 : i32
    return %c0_i32, %c0_i32_0 : i32, i32
  }
  func.func @transform_2(%arg0: i32) -> (i32, i32) {
    %c0_i32 = arith.constant 0 : i32
    %c0_i32_0 = arith.constant 0 : i32
    %c0_i32_1 = arith.constant 0 : i32
    return %c0_i32, %c0_i32_0 : i32, i32
  }
  func.func @transform_3(%arg0: i32) -> (i32, i32) {
    %c0_i32 = arith.constant 0 : i32
    %c0_i32_0 = arith.constant 0 : i32
    %c0_i32_1 = arith.constant 0 : i32
    return %c0_i32, %c0_i32_0 : i32, i32
  }
  func.func @transform_4(%arg0: i32) -> (i32, i32) {
    %c0_i32 = arith.constant 0 : i32
    %c0_i32_0 = arith.constant 0 : i32
    %c0_i32_1 = arith.constant 0 : i32
    return %c0_i32, %c0_i32_0 : i32, i32
  }
  func.func @transform_5(%arg0: i32) -> (i32, i32) {
    %c0_i32 = arith.constant 0 : i32
    %c0_i32_0 = arith.constant 0 : i32
    %c0_i32_1 = arith.constant 0 : i32
    return %c0_i32, %c0_i32_0 : i32, i32
  }
  func.func @transform_6(%arg0: i32) -> (i32, i32) {
    %c0_i32 = arith.constant 0 : i32
    %c0_i32_0 = arith.constant 0 : i32
    return %arg0, %c0_i32 : i32, i32
  }
}

</mosaic_0001>

<llo_original>
// kernel: lopkm_forward.1
$region0: #{lopkm_forward.1}
  #allocation0 [shape = 'u32[]', space=smem, size = 0x4, offset = 0x4, fixed_abs, tag = 'smem constant byte address 0x4 - core index']
  #allocation1 [shape = 'u32[144,128]{1,0:T(1,128)}', space=vmem, size = 0x12000, scoped, tag = 'internal scratch']
  %s0 = inlined_call_operand.vmem [shape: f32[16,32], index: 0, kind: input, shape index: {}]
  %s1 = inlined_call_operand.hbm [shape: f32[32,34], index: 1, kind: input, shape index: {}]
  %s2 = inlined_call_operand.hbm [shape: f32[1,34], index: 2, kind: input, shape index: {}]
  %s3 = inlined_call_operand.vmem [shape: f32[8,32], index: 3, kind: input, shape index: {}]
  %s4 = inlined_call_operand.hbm [shape: f32[8,32], index: 4, kind: input, shape index: {}]
  %s5 = inlined_call_operand.vmem [shape: f32[2,33], index: 5, kind: input, shape index: {}]
  %s6 = inlined_call_operand.vmem [shape: s32[16,8], index: 6, kind: output, shape index: {}]
  %s7 = sld [smem:[#allocation0]]
  $region69: #{lopkm_forward.1} parent=0
    _
  %s9 = ssub.s32 1, %s7
  %s10 = scalar_select 0, %s9, %s7
  $region1: #{lopkm_forward.1} parent=0
    #allocation2 [shape = 'u8[16384]{0}', space=vmem, size = 0x4000, scoped, tag = 'input window, operand 1, single buffered']
    #allocation3 [shape = 's32[2]{0}', space=sflag, size = 0x8, scoped, tag = 'scoped memory for lopkm_forward.1']
    #allocation4 [shape = 'u8[512]{0}', space=vmem, size = 0x400, scoped, tag = 'input window, operand 2, single buffered']
    #allocation5 [shape = 's32[1]{0}', space=sflag, size = 0x4, scoped, tag = 'scoped memory for lopkm_forward.1']
    #allocation6 [shape = 'u8[4096]{0}', space=vmem, size = 0x1000, scoped, tag = 'input window, operand 4, single buffered']
    %11 = vsyncpa [#allocation3], 0
    %12 = vsyncpa [#allocation5], 0
    loop: start=0, step=1, limit=4
    $region2: #{lopkm_forward.1} parent=1 // loop_pre_header
      _
    $region3: #{lopkm_forward.1} parent=1 // loop_header
      %s14 = sphi 0, %s18
      %p15 = scmp.ge.s32.totalorder %s14, 4
      %s24 = sphi 0, %s26
      %s27 = sphi 0, %s24
      %s28 = sphi 0, %s27
      %s44 = sphi 0, %s28
      %s48 = sphi 0, %s48
      %s50 = sphi 0, %s48
      %s51 = sphi 0, %s50
      %s65 = sphi 0, %s51
      %s69 = sphi 0, %s69
      %s71 = sphi 0, %s69
      %s72 = sphi 0, %s71
      %s86 = sphi 0, %s72
      %s90 = sphi 0, %s90
      %s92 = sphi 0, %s90
      %s93 = sphi 0, %s92
      %s107 = sphi 0, %s93
      %s111 = sphi 0, %s111
      %s113 = sphi 0, %s111
      %s114 = sphi 0, %s113
      %s128 = sphi 0, %s114
      %s132 = sphi 0, %s132
      %s134 = sphi 0, %s132
      %s135 = sphi 0, %s134
      %s149 = sphi 0, %s135
      %s155 = sphi 0, %s157
      %s158 = sphi 0, %s155
      %s159 = sphi 0, %s158
      %s175 = sphi 0, %s159
    $region4: #{lopkm_forward.1} parent=1 // loop_header_branch
      %17 = sbr.rel (%p15) target = $region8
    $region5: #{lopkm_forward.1} parent=1 // loop_body
      %s19 = ssub.s32 %s14, 1
      %s20 = ssub.s32 %s14, 2
      %s21 = sadd.s32 %s14, 1
      %s22 = ssub.s32 %s14, %s21
      %p23 = scmp.eq.s32.totalorder %s22, 0
      %s25 = sadd.s32 %s24, 1
      %s26 = scalar_select %p23, %s24, %s25
      %p29 = pneg %p23
      %p30 = scmp.eq.s32.totalorder %s14, 1
      %p31 = por %p29, %p30
      %p32 = scmp.ne.s32.totalorder %s24, %s27
      %p33 = scmp.eq.s32.totalorder %s14, 0
      %p34 = por %p32, %p33
      %p35 = scmp.ne.s32.totalorder %s24, %s27
      %p36 = scmp.eq.s32.totalorder %s19, 1
      %p37 = por %p35, %p36
      %p38 = scmp.ne.s32.totalorder %s27, %s28
      %p39 = scmp.eq.s32.totalorder %s19, 0
      %p40 = por %p38, %p39
      %p41 = scmp.ne.s32.totalorder %s27, %s28
      %p42 = scmp.eq.s32.totalorder %s20, 1
      %p43 = por %p41, %p42
      %p45 = scmp.ne.s32.totalorder %s28, %s44
      %p46 = scmp.eq.s32.totalorder %s20, 0
      %p47 = por %p45, %p46
      %s49 = sadd.s32 %s48, 1
      %p52 = scmp.eq.s32.totalorder %s14, 1
      %p53 = scmp.ne.s32.totalorder %s48, %s50
      %p54 = scmp.eq.s32.totalorder %s14, 0
      %p55 = por %p53, %p54
      %p56 = scmp.ne.s32.totalorder %s48, %s50
      %p57 = scmp.eq.s32.totalorder %s19, 1
      %p58 = por %p56, %p57
      %p59 = scmp.ne.s32.totalorder %s50, %s51
      %p60 = scmp.eq.s32.totalorder %s19, 0
      %p61 = por %p59, %p60
      %p62 = scmp.ne.s32.totalorder %s50, %s51
      %p63 = scmp.eq.s32.totalorder %s20, 1
      %p64 = por %p62, %p63
      %p66 = scmp.ne.s32.totalorder %s51, %s65
      %p67 = scmp.eq.s32.totalorder %s20, 0
      %p68 = por %p66, %p67
      %s70 = sadd.s32 %s69, 1
      %p73 = scmp.eq.s32.totalorder %s14, 1
      %p74 = scmp.ne.s32.totalorder %s69, %s71
      %p75 = scmp.eq.s32.totalorder %s14, 0
      %p76 = por %p74, %p75
      %p77 = scmp.ne.s32.totalorder %s69, %s71
      %p78 = scmp.eq.s32.totalorder %s19, 1
      %p79 = por %p77, %p78
      %p80 = scmp.ne.s32.totalorder %s71, %s72
      %p81 = scmp.eq.s32.totalorder %s19, 0
      %p82 = por %p80, %p81
      %p83 = scmp.ne.s32.totalorder %s71, %s72
      %p84 = scmp.eq.s32.totalorder %s20, 1
      %p85 = por %p83, %p84
      %p87 = scmp.ne.s32.totalorder %s72, %s86
      %p88 = scmp.eq.s32.totalorder %s20, 0
      %p89 = por %p87, %p88
      %s91 = sadd.s32 %s90, 1
      %p94 = scmp.eq.s32.totalorder %s14, 1
      %p95 = scmp.ne.s32.totalorder %s90, %s92
      %p96 = scmp.eq.s32.totalorder %s14, 0
      %p97 = por %p95, %p96
      %p98 = scmp.ne.s32.totalorder %s90, %s92
      %p99 = scmp.eq.s32.totalorder %s19, 1
      %p100 = por %p98, %p99
      %p101 = scmp.ne.s32.totalorder %s92, %s93
      %p102 = scmp.eq.s32.totalorder %s19, 0
      %p103 = por %p101, %p102
      %p104 = scmp.ne.s32.totalorder %s92, %s93
      %p105 = scmp.eq.s32.totalorder %s20, 1
      %p106 = por %p104, %p105
      %p108 = scmp.ne.s32.totalorder %s93, %s107
      %p109 = scmp.eq.s32.totalorder %s20, 0
      %p110 = por %p108, %p109
      %s112 = sadd.s32 %s111, 1
      %p115 = scmp.eq.s32.totalorder %s14, 1
      %p116 = scmp.ne.s32.totalorder %s111, %s113
      %p117 = scmp.eq.s32.totalorder %s14, 0
      %p118 = por %p116, %p117
      %p119 = scmp.ne.s32.totalorder %s111, %s113
      %p120 = scmp.eq.s32.totalorder %s19, 1
      %p121 = por %p119, %p120
      %p122 = scmp.ne.s32.totalorder %s113, %s114
      %p123 = scmp.eq.s32.totalorder %s19, 0
      %p124 = por %p122, %p123
      %p125 = scmp.ne.s32.totalorder %s113, %s114
      %p126 = scmp.eq.s32.totalorder %s20, 1
      %p127 = por %p125, %p126
      %p129 = scmp.ne.s32.totalorder %s114, %s128
      %p130 = scmp.eq.s32.totalorder %s20, 0
      %p131 = por %p129, %p130
      %s133 = sadd.s32 %s132, 1
      %p136 = scmp.eq.s32.totalorder %s14, 1
      %p137 = scmp.ne.s32.totalorder %s132, %s134
      %p138 = scmp.eq.s32.totalorder %s14, 0
      %p139 = por %p137, %p138
      %p140 = scmp.ne.s32.totalorder %s132, %s134
      %p141 = scmp.eq.s32.totalorder %s19, 1
      %p142 = por %p140, %p141
      %p143 = scmp.ne.s32.totalorder %s134, %s135
      %p144 = scmp.eq.s32.totalorder %s19, 0
      %p145 = por %p143, %p144
      %p146 = scmp.ne.s32.totalorder %s134, %s135
      %p147 = scmp.eq.s32.totalorder %s20, 1
      %p148 = por %p146, %p147
      %p150 = scmp.ne.s32.totalorder %s135, %s149
      %p151 = scmp.eq.s32.totalorder %s20, 0
      %p152 = por %p150, %p151
      %s153 = ssub.s32 %s14, %s21
      %p154 = scmp.eq.s32.totalorder %s153, 0
      %s156 = sadd.s32 %s155, 1
      %s157 = scalar_select %p154, %s155, %s156
      %p160 = pneg %p154
      %p161 = scmp.eq.s32.totalorder %s14, 1
      %p162 = por %p160, %p161
      %p163 = scmp.ne.s32.totalorder %s155, %s158
      %p164 = scmp.eq.s32.totalorder %s14, 0
      %p165 = por %p163, %p164
      %p166 = scmp.ne.s32.totalorder %s155, %s158
      %p167 = scmp.eq.s32.totalorder %s19, 1
      %p168 = por %p166, %p167
      %p169 = scmp.ne.s32.totalorder %s158, %s159
      %p170 = scmp.eq.s32.totalorder %s19, 0
      %p171 = por %p169, %p170
      %p172 = scmp.ne.s32.totalorder %s158, %s159
      %p173 = scmp.eq.s32.totalorder %s20, 1
      %p174 = por %p172, %p173
      %p176 = scmp.ne.s32.totalorder %s159, %s175
      %p177 = scmp.eq.s32.totalorder %s20, 0
      %p178 = por %p176, %p177
      %p179 = scmp.le.s32.totalorder 1, %s14
      %p180 = scmp.lt.s32.totalorder %s14, 3
      %p181 = pnand %p179, %p180
      %p182 = pneg %p181
      // Predicated region
      $region9: #{lopkm_forward.1} parent=5 // pred_check
        _
      $region10: #{lopkm_forward.1} parent=5 // pred_check_branch
        %184 = sbr.rel (%p181) target = $region12
      $region11: #{lopkm_forward.1} parent=5 // pred_region
        %s185 = ssub.s32 %s14, 1
        // Predicated region
        $region13: #{lopkm_forward.1} parent=11 // pred_check
          %p186 = pneg %p61
        $region14: #{lopkm_forward.1} parent=11 // pred_check_branch
          %188 = sbr.rel (%p186) target = $region16
        $region15: #{lopkm_forward.1} parent=11 // pred_region
          %s190 = ssub.s32 512, 512
          %191 = vsyncadd [#allocation3], %s190
          %s192 = sshll.u32 [#allocation2], 4
          %s193 = int_to_ptr.vmem [resolvable:$true] %s192
          %198 = dma.hbm_to_vmem [thread:$0]  %s1, 512, %s193, [#allocation3], 128, 128, 8
        $region16: #{lopkm_forward.1} parent=11 // pred_fallthru
          _
        // Predicated region
        $region17: #{lopkm_forward.1} parent=11 // pred_check
          %p199 = pneg %p82
        $region18: #{lopkm_forward.1} parent=11 // pred_check_branch
          %201 = sbr.rel (%p199) target = $region20
        $region19: #{lopkm_forward.1} parent=11 // pred_region
          %s203 = ssub.s32 16, 16
          %204 = vsyncadd [#allocation5], %s203
          %s206 = sshll.u32 [#allocation4], 4
          %s207 = int_to_ptr.vmem [resolvable:$true] %s206
          %209 = dma.hbm_to_vmem [thread:$0]  %s2, 16, %s207, [#allocation5]
        $region20: #{lopkm_forward.1} parent=11 // pred_fallthru
          _
        // Predicated region
        $region21: #{lopkm_forward.1} parent=11 // pred_check
          %p210 = pneg %p103
        $region22: #{lopkm_forward.1} parent=11 // pred_check_branch
          %212 = sbr.rel (%p210) target = $region24
        $region23: #{lopkm_forward.1} parent=11 // pred_region
          _
        $region24: #{lopkm_forward.1} parent=11 // pred_fallthru
          _
        // Predicated region
        $region25: #{lopkm_forward.1} parent=11 // pred_check
          %p213 = pneg %p124
        $region26: #{lopkm_forward.1} parent=11 // pred_check_branch
          %215 = sbr.rel (%p213) target = $region28
        $region27: #{lopkm_forward.1} parent=11 // pred_region
          %s217 = ssub.s32 128, 128
          %218 = vsyncadd [#allocation5], %s217
          %s220 = sshll.u32 [#allocation6], 4
          %s221 = int_to_ptr.vmem [resolvable:$true] %s220
          %223 = dma.hbm_to_vmem [thread:$0]  %s4, 128, %s221, [#allocation5]
        $region28: #{lopkm_forward.1} parent=11 // pred_fallthru
          _
        // Predicated region
        $region29: #{lopkm_forward.1} parent=11 // pred_check
          %p224 = pneg %p145
        $region30: #{lopkm_forward.1} parent=11 // pred_check_branch
          %226 = sbr.rel (%p224) target = $region32
        $region31: #{lopkm_forward.1} parent=11 // pred_region
          _
        $region32: #{lopkm_forward.1} parent=11 // pred_fallthru
          _
      $region12: #{lopkm_forward.1} parent=5 // pred_fallthru
        _
      %p227 = scmp.lt.s32.totalorder %s14, 2
      // Predicated region
      $region33: #{lopkm_forward.1} parent=5 // pred_check
        %p228 = pneg %p227
      $region34: #{lopkm_forward.1} parent=5 // pred_check_branch
        %230 = sbr.rel (%p228) target = $region36
      $region35: #{lopkm_forward.1} parent=5 // pred_region
        // Predicated region
        $region37: #{lopkm_forward.1} parent=35 // pred_check
          %p231 = pneg %p34
        $region38: #{lopkm_forward.1} parent=35 // pred_check_branch
          %233 = sbr.rel (%p231) target = $region40
        $region39: #{lopkm_forward.1} parent=35 // pred_region
          %p234 = scmp.lt.s32.totalorder %s14, 1
          %s235 = scalar_select %p234, %s14, 1
          %s236 = smul.addr %s235, 8
          %s237 = scalar_lea.vmem %s0, %s236
        $region40: #{lopkm_forward.1} parent=35 // pred_fallthru
          _
      $region36: #{lopkm_forward.1} parent=5 // pred_fallthru
        _
      %p238 = scmp.le.s32.totalorder 1, %s14
      %p239 = scmp.lt.s32.totalorder %s14, 3
      %p240 = pnand %p238, %p239
      %p241 = pneg %p240
      // Predicated region
      $region41: #{lopkm_forward.1} parent=5 // pred_check
        _
      $region42: #{lopkm_forward.1} parent=5 // pred_check_branch
        %243 = sbr.rel (%p240) target = $region44
      $region43: #{lopkm_forward.1} parent=5 // pred_region
        %s244 = ssub.s32 %s14, 1
        // Predicated region
        $region45: #{lopkm_forward.1} parent=43 // pred_check
          %p245 = pneg %p61
        $region46: #{lopkm_forward.1} parent=43 // pred_check_branch
          %247 = sbr.rel (%p245) target = $region48
        $region47: #{lopkm_forward.1} parent=43 // pred_region
          %248 = dma.done [#allocation3], 512
        $region48: #{lopkm_forward.1} parent=43 // pred_fallthru
          _
        // Predicated region
        $region49: #{lopkm_forward.1} parent=43 // pred_check
          %p249 = pneg %p82
        $region50: #{lopkm_forward.1} parent=43 // pred_check_branch
          %251 = sbr.rel (%p249) target = $region52
        $region51: #{lopkm_forward.1} parent=43 // pred_region
          %252 = dma.done [#allocation5], 16
        $region52: #{lopkm_forward.1} parent=43 // pred_fallthru
          _
        // Predicated region
        $region53: #{lopkm_forward.1} parent=43 // pred_check
          %p253 = pneg %p124
        $region54: #{lopkm_forward.1} parent=43 // pred_check_branch
          %255 = sbr.rel (%p253) target = $region56
        $region55: #{lopkm_forward.1} parent=43 // pred_region
          %256 = dma.done [#allocation5], 128
        $region56: #{lopkm_forward.1} parent=43 // pred_fallthru
          _
        %p257 = scmp.lt.s32.totalorder %s19, 1
        %s258 = scalar_select %p257, %s19, 1
        %s259 = smul.addr %s258, 8
        %s260 = scalar_lea.vmem %s0, %s259
        %p261 = pneg %p40
        %p262 = pneg %p37
        %p263 = pneg %p61
        %p264 = pneg %p58
        %p265 = pneg %p82
        %p266 = pneg %p79
        %p267 = pneg %p103
        %p268 = pneg %p100
        %p269 = pneg %p124
        %p270 = pneg %p121
        %p271 = pneg %p145
        %p272 = pneg %p142
        %p273 = pneg %p171
        %p274 = pneg %p168
        %p275 = scmp.lt.s32.totalorder %s19, 1
        %s276 = scalar_select %p275, %s19, 1
        %s277 = smul.addr %s276, 8
        %s278 = scalar_lea.vmem %s6, %s277
        %p279 = scmp.lt.s32.totalorder %s19, 1
        %s280 = scalar_select %p279, %s19, 1
        %s281 = smul.addr %s280, 8
        %s282 = scalar_lea.vmem %s0, %s281
        %p283 = scmp.lt.s32.totalorder %s19, 1
        %s284 = scalar_select %p283, %s19, 1
        %s285 = smul.addr %s284, 8
        %s286 = scalar_lea.vmem %s6, %s285
        %v287 = vld [vmem:[%s282] sm:$0xff]
        %v288 = vld [vmem:[#allocation2] sm:$0xff]
        %v289 = vld [vmem:[#allocation2 + $0x8] sm:$0xff]
        %v290 = vld [vmem:[#allocation2 + $0x10] sm:$0xff]
        %v291 = vld [vmem:[#allocation2 + $0x18] sm:$0xff]
        %v292 = vld [vmem:[#allocation4] sm:$0x1]
        %v294 = vlaneseq
        %v295 = vshrl.u32 %v294, 7
        %v296 = vsub.s32 0, %v295
        %v297 = vrot.slane %v292, %v296
        %vm299 = vcmask 261120
        %v301 = vsel %vm299, %v287, 0
        %303 = vmatprep.subr.mxu0 0.0
        %304 = vmatpush1.msra.mxu0 %v288
        %305 = vmatprep.subr.mxu0 0.0
        %306 = vmatpush1.msra.mxu0 %v289
        %307 = vmatprep.subr.mxu0 0.0
        %308 = vmatpush1.msra.mxu0 %v290
        %309 = vmatprep.subr.mxu0 0.0
        %310 = vmatpush1.msra.mxu0 %v291
        %311 = vmatprep.subr.mxu0 0.0
        %312 = vmatpush1.msra.mxu0 0.0
        %313 = vmatprep.subr.mxu0 0.0
        %314 = vmatpush1.msra.mxu0 0.0
        %315 = vmatprep.subr.mxu0 0.0
        %316 = vmatpush1.msra.mxu0 0.0
        %317 = vmatprep.subr.mxu0 0.0
        %318 = vmatpush1.msra.mxu0 0.0
        %319 = vmatprep.subr.mxu0 0.0
        %320 = vmatpush1.msra.mxu0 0.0
        %321 = vmatprep.subr.mxu0 0.0
        %322 = vmatpush1.msra.mxu0 0.0
        %323 = vmatprep.subr.mxu0 0.0
        %324 = vmatpush1.msra.mxu0 0.0
        %325 = vmatprep.subr.mxu0 0.0
        %326 = vmatpush1.msra.mxu0 0.0
        %327 = vmatprep.subr.mxu0 0.0
        %328 = vmatpush1.msra.mxu0 0.0
        %329 = vmatprep.subr.mxu0 0.0
        %330 = vmatpush1.msra.mxu0 0.0
        %331 = vmatprep.subr.mxu0 0.0
        %332 = vmatpush1.msra.mxu0 0.0
        %333 = vmatprep.subr.mxu0 0.0
        %334 = vmatpush1.msra.mxu0 0.0
        %335 = vmatprep.subr.mxu0 0.0
        %336 = vmatpush1.msra.mxu0 0.0
        %337 = vmatprep.subr.mxu0 0.0
        %338 = vmatpush1.msra.mxu0 0.0
        %339 = vmatprep.subr.mxu0 0.0
        %340 = vmatpush1.msra.mxu0 0.0
        %341 = vmatprep.subr.mxu0 0.0
        %342 = vmatpush1.msra.mxu0 0.0
        %343 = vmatprep.subr.mxu0 0.0
        %344 = vmatpush1.msra.mxu0 0.0
        %345 = vmatprep.subr.mxu0 0.0
        %346 = vmatpush1.msra.mxu0 0.0
        %347 = vmatprep.subr.mxu0 0.0
        %348 = vmatpush1.msra.mxu0 0.0
        %349 = vmatprep.subr.mxu0 0.0
        %350 = vmatpush1.msra.mxu0 0.0
        %351 = vmatprep.subr.mxu0 0.0
        %352 = vmatpush1.msra.mxu0 0.0
        %353 = vmatprep.subr.mxu0 0.0
        %354 = vmatpush1.msra.mxu0 0.0
        %355 = vmatprep.subr.mxu0 0.0
        %356 = vmatpush1.msra.mxu0 0.0
        %357 = vmatprep.subr.mxu0 0.0
        %358 = vmatpush1.msra.mxu0 0.0
        %359 = vmatprep.subr.mxu0 0.0
        %360 = vmatpush1.msra.mxu0 0.0
        %361 = vmatprep.subr.mxu0 0.0
        %362 = vmatpush1.msra.mxu0 0.0
        %363 = vmatprep.subr.mxu0 0.0
        %364 = vmatpush1.msra.mxu0 0.0
        %365 = vmatprep.subr.mxu0 0.0
        %366 = vmatpush1.msra.mxu0 0.0
        %367 = vmatprep.mubr.f32.mxu0 0.0
        %368 = vmatmul.mubr.f32.gmra.mrb[0].mxu0 %v301
        %v369 = vpop.f32.mrb[0].mxu0
        %v370 = vadd.f32 %v297, %v369
        %v371 = vpop.f32.mrb[0].mxu0
        %372 = vdwg.mxu0
        %v373 = vlaneseq
        %v374 = vand.u32 %v373, 127
        %vm375 = vcmask 277760
        %v376 = vsel %vm375, %v370, inf
        %377 = vmin.xlane.f32.xlu0 %v376
        %v378 = vpop.xlane.xlu0 %377
        %vm379 = vcmp.eq.f32.partialorder %v370, %v378
        %380 = vrot.lane.b32.xlu0 %v374, 32
        %v381 = vpop.permute.xlu0 %380
        %v382 = vsel %vm379, %v381, 2
        %v383 = vsel %vm375, %v382, 2147483647
        %v384 = vand.u32 %v383, 65535
        %v385 = vshra.s32 %v383, 16
        %v386 = vcvt.s32.f32 %v384
        %v387 = vcvt.s32.f32 %v385
        %388 = vmin.xlane.f32.xlu0 %v387
        %v389 = vpop.xlane.xlu0 %388
        %vm390 = vcmp.eq.f32.partialorder %v387, %v389
        %v391 = vsel %vm390, %v386, inf
        %392 = vmin.xlane.f32.xlu0 %v391
        %v393 = vpop.xlane.xlu0 %392
        %v394 = vcvt.f32.s32 %v393
        %v395 = vcvt.f32.s32 %v389
        %v396 = vshll.u32 %v395, 16
        %v397 = vadd.s32 %v396, %v394
        %vm398 = vcmp.eq.s32.totalorder %v397, %v374
        %v399 = vsel %vm398, 1, 0
        %v400 = vcvt.s32.f32 %v399
        %v401 = vld [vmem:[%s5] sm:$0x3]
        %vm402 = vcmask 15360
        %v404 = vsel %vm402, %v400, 0
        %vm406 = vcmask 1041408
        %v408 = vsel %vm406, %v401, 0
        %410 = vmatprep.subr.mxu0 0.0
        %411 = vmatpush1.msra.mxu0 %v408
        %412 = vmatprep.subr.mxu0 0.0
        %413 = vmatpush1.msra.mxu0 0.0
        %414 = vmatprep.subr.mxu0 0.0
        %415 = vmatpush1.msra.mxu0 0.0
        %416 = vmatprep.subr.mxu0 0.0
        %417 = vmatpush1.msra.mxu0 0.0
        %418 = vmatprep.subr.mxu0 0.0
        %419 = vmatpush1.msra.mxu0 0.0
        %420 = vmatprep.subr.mxu0 0.0
        %421 = vmatpush1.msra.mxu0 0.0
        %422 = vmatprep.subr.mxu0 0.0
        %423 = vmatpush1.msra.mxu0 0.0
        %424 = vmatprep.subr.mxu0 0.0
        %425 = vmatpush1.msra.mxu0 0.0
        %426 = vmatprep.subr.mxu0 0.0
        %427 = vmatpush1.msra.mxu0 0.0
        %428 = vmatprep.subr.mxu0 0.0
        %429 = vmatpush1.msra.mxu0 0.0
        %430 = vmatprep.subr.mxu0 0.0
        %431 = vmatpush1.msra.mxu0 0.0
        %432 = vmatprep.subr.mxu0 0.0
        %433 = vmatpush1.msra.mxu0 0.0
        %434 = vmatprep.subr.mxu0 0.0
        %435 = vmatpush1.msra.mxu0 0.0
        %436 = vmatprep.subr.mxu0 0.0
        %437 = vmatpush1.msra.mxu0 0.0
        %438 = vmatprep.subr.mxu0 0.0
        %439 = vmatpush1.msra.mxu0 0.0
        %440 = vmatprep.subr.mxu0 0.0
        %441 = vmatpush1.msra.mxu0 0.0
        %442 = vmatprep.subr.mxu0 0.0
        %443 = vmatpush1.msra.mxu0 0.0
        %444 = vmatprep.subr.mxu0 0.0
        %445 = vmatpush1.msra.mxu0 0.0
        %446 = vmatprep.subr.mxu0 0.0
        %447 = vmatpush1.msra.mxu0 0.0
        %448 = vmatprep.subr.mxu0 0.0
        %449 = vmatpush1.msra.mxu0 0.0
        %450 = vmatprep.subr.mxu0 0.0
        %451 = vmatpush1.msra.mxu0 0.0
        %452 = vmatprep.subr.mxu0 0.0
        %453 = vmatpush1.msra.mxu0 0.0
        %454 = vmatprep.subr.mxu0 0.0
        %455 = vmatpush1.msra.mxu0 0.0
        %456 = vmatprep.subr.mxu0 0.0
        %457 = vmatpush1.msra.mxu0 0.0
        %458 = vmatprep.subr.mxu0 0.0
        %459 = vmatpush1.msra.mxu0 0.0
        %460 = vmatprep.subr.mxu0 0.0
        %461 = vmatpush1.msra.mxu0 0.0
        %462 = vmatprep.subr.mxu0 0.0
        %463 = vmatpush1.msra.mxu0 0.0
        %464 = vmatprep.subr.mxu0 0.0
        %465 = vmatpush1.msra.mxu0 0.0
        %466 = vmatprep.subr.mxu0 0.0
        %467 = vmatpush1.msra.mxu0 0.0
        %468 = vmatprep.subr.mxu0 0.0
        %469 = vmatpush1.msra.mxu0 0.0
        %470 = vmatprep.subr.mxu0 0.0
        %471 = vmatpush1.msra.mxu0 0.0
        %472 = vmatprep.subr.mxu0 0.0
        %473 = vmatpush1.msra.mxu0 0.0
        %474 = vmatprep.mubr.f32.mxu0 0.0
        %475 = vmatmul.mubr.f32.gmra.mrb[0].mxu0 %v404
        %v476 = vpop.f32.mrb[0].mxu0
        %v477 = vadd.f32 0.0, %v476
        %v478 = vpop.f32.mrb[0].mxu0
        %479 = vdwg.mxu0
        %vm480 = vcmp.eq.s32.totalorder %v397, 0
        %v481 = vsel %vm480, 1, 0
        %vm482 = vcmp.eq.s32.totalorder %v481, 1
        %v483 = vsel %vm482, %v370, 0.0
        %v484 = vadd.f32 %v483, 0.0
        %v485 = vld [vmem:[%s3] sm:$0xff]
        %v486 = vld [vmem:[#allocation6] sm:$0xff]
        %vm487 = vcmp.eq.s32.totalorder %v397, 1
        %v488 = vsel %vm487, 1, 0
        %vm489 = vcmp.eq.s32.totalorder %v488, 1
        %v490 = vsel %vm489, %v370, 0.0
        %492 = vrot.lane.b32.xlu0 %v490, 112
        %v493 = vpop.permute.xlu0 %492
        %v495 = vadd.f32 %v484, %v493
        %497 = vrot.lane.b32.xlu0 %v485, 112
        %v498 = vpop.permute.xlu0 %497
        %vm500 = vcmask 64512
        %v501 = vsel %vm500, %v493, 0
        %503 = vmatprep.subr.mxu0 0.0
        %504 = vmatpush1.msra.mxu0 %v498
        %505 = vmatprep.subr.mxu0 0.0
        %506 = vmatpush1.msra.mxu0 0.0
        %507 = vmatprep.subr.mxu0 0.0
        %508 = vmatpush1.msra.mxu0 0.0
        %509 = vmatprep.subr.mxu0 0.0
        %510 = vmatpush1.msra.mxu0 0.0
        %511 = vmatprep.subr.mxu0 0.0
        %512 = vmatpush1.msra.mxu0 0.0
        %513 = vmatprep.subr.mxu0 0.0
        %514 = vmatpush1.msra.mxu0 0.0
        %515 = vmatprep.subr.mxu0 0.0
        %516 = vmatpush1.msra.mxu0 0.0
        %517 = vmatprep.subr.mxu0 0.0
        %518 = vmatpush1.msra.mxu0 0.0
        %519 = vmatprep.subr.mxu0 0.0
        %520 = vmatpush1.msra.mxu0 0.0
        %521 = vmatprep.subr.mxu0 0.0
        %522 = vmatpush1.msra.mxu0 0.0
        %523 = vmatprep.subr.mxu0 0.0
        %524 = vmatpush1.msra.mxu0 0.0
        %525 = vmatprep.subr.mxu0 0.0
        %526 = vmatpush1.msra.mxu0 0.0
        %527 = vmatprep.subr.mxu0 0.0
        %528 = vmatpush1.msra.mxu0 0.0
        %529 = vmatprep.subr.mxu0 0.0
        %530 = vmatpush1.msra.mxu0 0.0
        %531 = vmatprep.subr.mxu0 0.0
        %532 = vmatpush1.msra.mxu0 0.0
        %533 = vmatprep.subr.mxu0 0.0
        %534 = vmatpush1.msra.mxu0 0.0
        %535 = vmatprep.subr.mxu0 0.0
        %536 = vmatpush1.msra.mxu0 0.0
        %537 = vmatprep.subr.mxu0 0.0
        %538 = vmatpush1.msra.mxu0 0.0
        %539 = vmatprep.subr.mxu0 0.0
        %540 = vmatpush1.msra.mxu0 0.0
        %541 = vmatprep.subr.mxu0 0.0
        %542 = vmatpush1.msra.mxu0 0.0
        %543 = vmatprep.subr.mxu0 0.0
        %544 = vmatpush1.msra.mxu0 0.0
        %545 = vmatprep.subr.mxu0 0.0
        %546 = vmatpush1.msra.mxu0 0.0
        %547 = vmatprep.subr.mxu0 0.0
        %548 = vmatpush1.msra.mxu0 0.0
        %549 = vmatprep.subr.mxu0 0.0
        %550 = vmatpush1.msra.mxu0 0.0
        %551 = vmatprep.subr.mxu0 0.0
        %552 = vmatpush1.msra.mxu0 0.0
        %553 = vmatprep.subr.mxu0 0.0
        %554 = vmatpush1.msra.mxu0 0.0
        %555 = vmatprep.subr.mxu0 0.0
        %556 = vmatpush1.msra.mxu0 0.0
        %557 = vmatprep.subr.mxu0 0.0
        %558 = vmatpush1.msra.mxu0 0.0
        %559 = vmatprep.subr.mxu0 0.0
        %560 = vmatpush1.msra.mxu0 0.0
        %561 = vmatprep.subr.mxu0 0.0
        %562 = vmatpush1.msra.mxu0 0.0
        %563 = vmatprep.subr.mxu0 0.0
        %564 = vmatpush1.msra.mxu0 0.0
        %565 = vmatprep.subr.mxu0 0.0
        %566 = vmatpush1.msra.mxu0 0.0
        %567 = vmatprep.mubr.f32.mxu0 0.0
        %568 = vmatmul.mubr.f32.gmra.mrb[0].mxu0 %v501
        %v569 = vpop.f32.mrb[0].mxu0
        %v570 = vadd.f32 0.0, %v569
        %v571 = vpop.f32.mrb[0].mxu0
        %572 = vdwg.mxu0
        %v574 = vsel %vm500, %v483, 0
        %576 = vmatprep.subr.mxu0 0.0
        %577 = vmatpush1.msra.mxu0 %v485
        %578 = vmatprep.subr.mxu0 0.0
        %579 = vmatpush1.msra.mxu0 0.0
        %580 = vmatprep.subr.mxu0 0.0
        %581 = vmatpush1.msra.mxu0 0.0
        %582 = vmatprep.subr.mxu0 0.0
        %583 = vmatpush1.msra.mxu0 0.0
        %584 = vmatprep.subr.mxu0 0.0
        %585 = vmatpush1.msra.mxu0 0.0
        %586 = vmatprep.subr.mxu0 0.0
        %587 = vmatpush1.msra.mxu0 0.0
        %588 = vmatprep.subr.mxu0 0.0
        %589 = vmatpush1.msra.mxu0 0.0
        %590 = vmatprep.subr.mxu0 0.0
        %591 = vmatpush1.msra.mxu0 0.0
        %592 = vmatprep.subr.mxu0 0.0
        %593 = vmatpush1.msra.mxu0 0.0
        %594 = vmatprep.subr.mxu0 0.0
        %595 = vmatpush1.msra.mxu0 0.0
        %596 = vmatprep.subr.mxu0 0.0
        %597 = vmatpush1.msra.mxu0 0.0
        %598 = vmatprep.subr.mxu0 0.0
        %599 = vmatpush1.msra.mxu0 0.0
        %600 = vmatprep.subr.mxu0 0.0
        %601 = vmatpush1.msra.mxu0 0.0
        %602 = vmatprep.subr.mxu0 0.0
        %603 = vmatpush1.msra.mxu0 0.0
        %604 = vmatprep.subr.mxu0 0.0
        %605 = vmatpush1.msra.mxu0 0.0
        %606 = vmatprep.subr.mxu0 0.0
        %607 = vmatpush1.msra.mxu0 0.0
        %608 = vmatprep.subr.mxu0 0.0
        %609 = vmatpush1.msra.mxu0 0.0
        %610 = vmatprep.subr.mxu0 0.0
        %611 = vmatpush1.msra.mxu0 0.0
        %612 = vmatprep.subr.mxu0 0.0
        %613 = vmatpush1.msra.mxu0 0.0
        %614 = vmatprep.subr.mxu0 0.0
        %615 = vmatpush1.msra.mxu0 0.0
        %616 = vmatprep.subr.mxu0 0.0
        %617 = vmatpush1.msra.mxu0 0.0
        %618 = vmatprep.subr.mxu0 0.0
        %619 = vmatpush1.msra.mxu0 0.0
        %620 = vmatprep.subr.mxu0 0.0
        %621 = vmatpush1.msra.mxu0 0.0
        %622 = vmatprep.subr.mxu0 0.0
        %623 = vmatpush1.msra.mxu0 0.0
        %624 = vmatprep.subr.mxu0 0.0
        %625 = vmatpush1.msra.mxu0 0.0
        %626 = vmatprep.subr.mxu0 0.0
        %627 = vmatpush1.msra.mxu0 0.0
        %628 = vmatprep.subr.mxu0 0.0
        %629 = vmatpush1.msra.mxu0 0.0
        %630 = vmatprep.subr.mxu0 0.0
        %631 = vmatpush1.msra.mxu0 0.0
        %632 = vmatprep.subr.mxu0 0.0
        %633 = vmatpush1.msra.mxu0 0.0
        %634 = vmatprep.subr.mxu0 0.0
        %635 = vmatpush1.msra.mxu0 0.0
        %636 = vmatprep.subr.mxu0 0.0
        %637 = vmatpush1.msra.mxu0 0.0
        %638 = vmatprep.subr.mxu0 0.0
        %639 = vmatpush1.msra.mxu0 0.0
        %640 = vmatprep.mubr.f32.mxu0 0.0
        %641 = vmatmul.mubr.f32.gmra.mrb[0].mxu0 %v574
        %v642 = vpop.f32.mrb[0].mxu0
        %v643 = vadd.f32 %v570, %v642
        %v644 = vpop.f32.mrb[0].mxu0
        %645 = vdwg.mxu0
        %646 = vrot.lane.b32.xlu0 %v490, 104
        %v647 = vpop.permute.xlu0 %646
        %649 = vrot.lane.b32.xlu0 %v486, 112
        %v650 = vpop.permute.xlu0 %649
        %v652 = vsel %vm500, %v647, 0
        %654 = vmatprep.subr.mxu0 0.0
        %655 = vmatpush1.msra.mxu0 %v650
        %656 = vmatprep.subr.mxu0 0.0
        %657 = vmatpush1.msra.mxu0 0.0
        %658 = vmatprep.subr.mxu0 0.0
        %659 = vmatpush1.msra.mxu0 0.0
        %660 = vmatprep.subr.mxu0 0.0
        %661 = vmatpush1.msra.mxu0 0.0
        %662 = vmatprep.subr.mxu0 0.0
        %663 = vmatpush1.msra.mxu0 0.0
        %664 = vmatprep.subr.mxu0 0.0
        %665 = vmatpush1.msra.mxu0 0.0
        %666 = vmatprep.subr.mxu0 0.0
        %667 = vmatpush1.msra.mxu0 0.0
        %668 = vmatprep.subr.mxu0 0.0
        %669 = vmatpush1.msra.mxu0 0.0
        %670 = vmatprep.subr.mxu0 0.0
        %671 = vmatpush1.msra.mxu0 0.0
        %672 = vmatprep.subr.mxu0 0.0
        %673 = vmatpush1.msra.mxu0 0.0
        %674 = vmatprep.subr.mxu0 0.0
        %675 = vmatpush1.msra.mxu0 0.0
        %676 = vmatprep.subr.mxu0 0.0
        %677 = vmatpush1.msra.mxu0 0.0
        %678 = vmatprep.subr.mxu0 0.0
        %679 = vmatpush1.msra.mxu0 0.0
        %680 = vmatprep.subr.mxu0 0.0
        %681 = vmatpush1.msra.mxu0 0.0
        %682 = vmatprep.subr.mxu0 0.0
        %683 = vmatpush1.msra.mxu0 0.0
        %684 = vmatprep.subr.mxu0 0.0
        %685 = vmatpush1.msra.mxu0 0.0
        %686 = vmatprep.subr.mxu0 0.0
        %687 = vmatpush1.msra.mxu0 0.0
        %688 = vmatprep.subr.mxu0 0.0
        %689 = vmatpush1.msra.mxu0 0.0
        %690 = vmatprep.subr.mxu0 0.0
        %691 = vmatpush1.msra.mxu0 0.0
        %692 = vmatprep.subr.mxu0 0.0
        %693 = vmatpush1.msra.mxu0 0.0
        %694 = vmatprep.subr.mxu0 0.0
        %695 = vmatpush1.msra.mxu0 0.0
        %696 = vmatprep.subr.mxu0 0.0
        %697 = vmatpush1.msra.mxu0 0.0
        %698 = vmatprep.subr.mxu0 0.0
        %699 = vmatpush1.msra.mxu0 0.0
        %700 = vmatprep.subr.mxu0 0.0
        %701 = vmatpush1.msra.mxu0 0.0
        %702 = vmatprep.subr.mxu0 0.0
        %703 = vmatpush1.msra.mxu0 0.0
        %704 = vmatprep.subr.mxu0 0.0
        %705 = vmatpush1.msra.mxu0 0.0
        %706 = vmatprep.subr.mxu0 0.0
        %707 = vmatpush1.msra.mxu0 0.0
        %708 = vmatprep.subr.mxu0 0.0
        %709 = vmatpush1.msra.mxu0 0.0
        %710 = vmatprep.subr.mxu0 0.0
        %711 = vmatpush1.msra.mxu0 0.0
        %712 = vmatprep.subr.mxu0 0.0
        %713 = vmatpush1.msra.mxu0 0.0
        %714 = vmatprep.subr.mxu0 0.0
        %715 = vmatpush1.msra.mxu0 0.0
        %716 = vmatprep.subr.mxu0 0.0
        %717 = vmatpush1.msra.mxu0 0.0
        %718 = vmatprep.mubr.f32.mxu0 0.0
        %719 = vmatmul.mubr.f32.gmra.mrb[0].mxu0 %v652
        %v720 = vpop.f32.mrb[0].mxu0
        %v721 = vadd.f32 0.0, %v720
        %v722 = vpop.f32.mrb[0].mxu0
        %723 = vdwg.mxu0
        %724 = vrot.lane.b32.xlu0 %v483, 120
        %v725 = vpop.permute.xlu0 %724
        %v726 = vsel %vm500, %v725, 0
        %728 = vmatprep.subr.mxu0 0.0
        %729 = vmatpush1.msra.mxu0 %v486
        %730 = vmatprep.subr.mxu0 0.0
        %731 = vmatpush1.msra.mxu0 0.0
        %732 = vmatprep.subr.mxu0 0.0
        %733 = vmatpush1.msra.mxu0 0.0
        %734 = vmatprep.subr.mxu0 0.0
        %735 = vmatpush1.msra.mxu0 0.0
        %736 = vmatprep.subr.mxu0 0.0
        %737 = vmatpush1.msra.mxu0 0.0
        %738 = vmatprep.subr.mxu0 0.0
        %739 = vmatpush1.msra.mxu0 0.0
        %740 = vmatprep.subr.mxu0 0.0
        %741 = vmatpush1.msra.mxu0 0.0
        %742 = vmatprep.subr.mxu0 0.0
        %743 = vmatpush1.msra.mxu0 0.0
        %744 = vmatprep.subr.mxu0 0.0
        %745 = vmatpush1.msra.mxu0 0.0
        %746 = vmatprep.subr.mxu0 0.0
        %747 = vmatpush1.msra.mxu0 0.0
        %748 = vmatprep.subr.mxu0 0.0
        %749 = vmatpush1.msra.mxu0 0.0
        %750 = vmatprep.subr.mxu0 0.0
        %751 = vmatpush1.msra.mxu0 0.0
        %752 = vmatprep.subr.mxu0 0.0
        %753 = vmatpush1.msra.mxu0 0.0
        %754 = vmatprep.subr.mxu0 0.0
        %755 = vmatpush1.msra.mxu0 0.0
        %756 = vmatprep.subr.mxu0 0.0
        %757 = vmatpush1.msra.mxu0 0.0
        %758 = vmatprep.subr.mxu0 0.0
        %759 = vmatpush1.msra.mxu0 0.0
        %760 = vmatprep.subr.mxu0 0.0
        %761 = vmatpush1.msra.mxu0 0.0
        %762 = vmatprep.subr.mxu0 0.0
        %763 = vmatpush1.msra.mxu0 0.0
        %764 = vmatprep.subr.mxu0 0.0
        %765 = vmatpush1.msra.mxu0 0.0
        %766 = vmatprep.subr.mxu0 0.0
        %767 = vmatpush1.msra.mxu0 0.0
        %768 = vmatprep.subr.mxu0 0.0
        %769 = vmatpush1.msra.mxu0 0.0
        %770 = vmatprep.subr.mxu0 0.0
        %771 = vmatpush1.msra.mxu0 0.0
        %772 = vmatprep.subr.mxu0 0.0
        %773 = vmatpush1.msra.mxu0 0.0
        %774 = vmatprep.subr.mxu0 0.0
        %775 = vmatpush1.msra.mxu0 0.0
        %776 = vmatprep.subr.mxu0 0.0
        %777 = vmatpush1.msra.mxu0 0.0
        %778 = vmatprep.subr.mxu0 0.0
        %779 = vmatpush1.msra.mxu0 0.0
        %780 = vmatprep.subr.mxu0 0.0
        %781 = vmatpush1.msra.mxu0 0.0
        %782 = vmatprep.subr.mxu0 0.0
        %783 = vmatpush1.msra.mxu0 0.0
        %784 = vmatprep.subr.mxu0 0.0
        %785 = vmatpush1.msra.mxu0 0.0
        %786 = vmatprep.subr.mxu0 0.0
        %787 = vmatpush1.msra.mxu0 0.0
        %788 = vmatprep.subr.mxu0 0.0
        %789 = vmatpush1.msra.mxu0 0.0
        %790 = vmatprep.subr.mxu0 0.0
        %791 = vmatpush1.msra.mxu0 0.0
        %792 = vmatprep.mubr.f32.mxu0 0.0
        %793 = vmatmul.mubr.f32.gmra.mrb[0].mxu0 %v726
        %v794 = vpop.f32.mrb[0].mxu0
        %v795 = vadd.f32 %v721, %v794
        %v796 = vpop.f32.mrb[0].mxu0
        %797 = vdwg.mxu0
        %v798 = vmul.f32 %v495, %v495
        %v799 = vsel %vm500, %v798, 0.0
        %800 = vadd.xlane.f32.xlu0 %v799
        %v801 = vpop.xlane.xlu0 %800
        %803 = vrot.lane.b32.xlu0 %v798, 120
        %v804 = vpop.permute.xlu0 %803
        %v806 = vsel %vm500, %v804, 0.0
        %807 = vadd.xlane.f32.xlu0 %v806
        %v808 = vpop.xlane.xlu0 %807
        %v809 = vadd.f32 %v801, %v643
        %v810 = vadd.f32 %v809, %v477
        %v811 = vmax.f32 %v810, 0.0
        %v812 = vmul.f32 %v811, 0.0625
        %v813 = vadd.f32 %v808, %v795
        %815 = vrot.lane.b32.xlu0 %v477, 112
        %v816 = vpop.permute.xlu0 %815
        %v818 = vadd.f32 %v813, %v816
        %v819 = vmax.f32 %v818, 0.0
        %v820 = vmul.f32 %v819, 0.0625
        %v822 = vand.u32 %v812, 4294967280
        %v823 = vor.u32 %v822, %v374
        %vm824 = vcmask 130048
        %v825 = vsel %vm824, %v823, 2147483647
        %v826 = vand.u32 %v825, 65535
        %v827 = vshra.s32 %v825, 16
        %v828 = vcvt.s32.f32 %v826
        %v829 = vcvt.s32.f32 %v827
        %830 = vmin.xlane.f32.xlu0 %v829
        %v831 = vpop.xlane.xlu0 %830
        %vm832 = vcmp.eq.f32.partialorder %v829, %v831
        %v833 = vsel %vm832, %v828, inf
        %834 = vmin.xlane.f32.xlu0 %v833
        %v835 = vpop.xlane.xlu0 %834
        %v836 = vcvt.f32.s32 %v835
        %v837 = vcvt.f32.s32 %v831
        %v838 = vshll.u32 %v837, 16
        %v839 = vadd.s32 %v838, %v836
        %vm840 = vcmp.eq.s32.totalorder %v374, 0
        %v841 = vand.u32 %v839, 4294967280
        %v843 = vsel %vm840, %v841, 0.0
        %v844 = vand.u32 %v839, 15
        %v845 = vsel %vm840, %v844, 0
        %vm846 = vcmp.eq.s32.totalorder %v823, %v839
        %v847 = vsel %vm846, 2147483647, %v823
        %v848 = vsel %vm824, %v847, 2147483647
        %v849 = vand.u32 %v848, 65535
        %v850 = vshra.s32 %v848, 16
        %v851 = vcvt.s32.f32 %v849
        %v852 = vcvt.s32.f32 %v850
        %853 = vmin.xlane.f32.xlu0 %v852
        %v854 = vpop.xlane.xlu0 %853
        %vm855 = vcmp.eq.f32.partialorder %v852, %v854
        %v856 = vsel %vm855, %v851, inf
        %857 = vmin.xlane.f32.xlu0 %v856
        %v858 = vpop.xlane.xlu0 %857
        %v859 = vcvt.f32.s32 %v858
        %v860 = vcvt.f32.s32 %v854
        %v861 = vshll.u32 %v860, 16
        %v862 = vadd.s32 %v861, %v859
        %vm863 = vcmp.eq.s32.totalorder %v374, 1
        %v864 = vand.u32 %v862, 4294967280
        %v866 = vsel %vm863, %v864, %v843
        %v867 = vand.u32 %v862, 15
        %v868 = vsel %vm863, %v867, %v845
        %vm869 = vcmp.eq.s32.totalorder %v847, %v862
        %v870 = vsel %vm869, 2147483647, %v847
        %v871 = vsel %vm824, %v870, 2147483647
        %v872 = vand.u32 %v871, 65535
        %v873 = vshra.s32 %v871, 16
        %v874 = vcvt.s32.f32 %v872
        %v875 = vcvt.s32.f32 %v873
        %876 = vmin.xlane.f32.xlu0 %v875
        %v877 = vpop.xlane.xlu0 %876
        %vm878 = vcmp.eq.f32.partialorder %v875, %v877
        %v879 = vsel %vm878, %v874, inf
        %880 = vmin.xlane.f32.xlu0 %v879
        %v881 = vpop.xlane.xlu0 %880
        %v882 = vcvt.f32.s32 %v881
        %v883 = vcvt.f32.s32 %v877
        %v884 = vshll.u32 %v883, 16
        %v885 = vadd.s32 %v884, %v882
        %vm886 = vcmp.eq.s32.totalorder %v374, 2
        %v887 = vand.u32 %v885, 4294967280
        %v889 = vsel %vm886, %v887, %v866
        %v890 = vand.u32 %v885, 15
        %v891 = vsel %vm886, %v890, %v868
        %vm892 = vcmp.eq.s32.totalorder %v870, %v885
        %v893 = vsel %vm892, 2147483647, %v870
        %v894 = vsel %vm824, %v893, 2147483647
        %v895 = vand.u32 %v894, 65535
        %v896 = vshra.s32 %v894, 16
        %v897 = vcvt.s32.f32 %v895
        %v898 = vcvt.s32.f32 %v896
        %899 = vmin.xlane.f32.xlu0 %v898
        %v900 = vpop.xlane.xlu0 %899
        %vm901 = vcmp.eq.f32.partialorder %v898, %v900
        %v902 = vsel %vm901, %v897, inf
        %903 = vmin.xlane.f32.xlu0 %v902
        %v904 = vpop.xlane.xlu0 %903
        %v905 = vcvt.f32.s32 %v904
        %v906 = vcvt.f32.s32 %v900
        %v907 = vshll.u32 %v906, 16
        %v908 = vadd.s32 %v907, %v905
        %vm909 = vcmp.eq.s32.totalorder %v374, 3
        %v910 = vand.u32 %v908, 4294967280
        %v912 = vsel %vm909, %v910, %v889
        %v913 = vand.u32 %v908, 15
        %v914 = vsel %vm909, %v913, %v891
        %v916 = vand.u32 %v820, 4294967280
        %v917 = vor.u32 %v916, %v374
        %v918 = vsel %vm824, %v917, 2147483647
        %v919 = vand.u32 %v918, 65535
        %v920 = vshra.s32 %v918, 16
        %v921 = vcvt.s32.f32 %v919
        %v922 = vcvt.s32.f32 %v920
        %923 = vmin.xlane.f32.xlu0 %v922
        %v924 = vpop.xlane.xlu0 %923
        %vm925 = vcmp.eq.f32.partialorder %v922, %v924
        %v926 = vsel %vm925, %v921, inf
        %927 = vmin.xlane.f32.xlu0 %v926
        %v928 = vpop.xlane.xlu0 %927
        %v929 = vcvt.f32.s32 %v928
        %v930 = vcvt.f32.s32 %v924
        %v931 = vshll.u32 %v930, 16
        %v932 = vadd.s32 %v931, %v929
        %v933 = vand.u32 %v932, 4294967280
        %v935 = vsel %vm840, %v933, 0.0
        %v936 = vand.u32 %v932, 15
        %v937 = vsel %vm840, %v936, 0
        %vm938 = vcmp.eq.s32.totalorder %v917, %v932
        %v939 = vsel %vm938, 2147483647, %v917
        %v940 = vsel %vm824, %v939, 2147483647
        %v941 = vand.u32 %v940, 65535
        %v942 = vshra.s32 %v940, 16
        %v943 = vcvt.s32.f32 %v941
        %v944 = vcvt.s32.f32 %v942
        %945 = vmin.xlane.f32.xlu0 %v944
        %v946 = vpop.xlane.xlu0 %945
        %vm947 = vcmp.eq.f32.partialorder %v944, %v946
        %v948 = vsel %vm947, %v943, inf
        %949 = vmin.xlane.f32.xlu0 %v948
        %v950 = vpop.xlane.xlu0 %949
        %v951 = vcvt.f32.s32 %v950
        %v952 = vcvt.f32.s32 %v946
        %v953 = vshll.u32 %v952, 16
        %v954 = vadd.s32 %v953, %v951
        %v955 = vand.u32 %v954, 4294967280
        %v957 = vsel %vm863, %v955, %v935
        %v958 = vand.u32 %v954, 15
        %v959 = vsel %vm863, %v958, %v937
        %vm960 = vcmp.eq.s32.totalorder %v939, %v954
        %v961 = vsel %vm960, 2147483647, %v939
        %v962 = vsel %vm824, %v961, 2147483647
        %v963 = vand.u32 %v962, 65535
        %v964 = vshra.s32 %v962, 16
        %v965 = vcvt.s32.f32 %v963
        %v966 = vcvt.s32.f32 %v964
        %967 = vmin.xlane.f32.xlu0 %v966
        %v968 = vpop.xlane.xlu0 %967
        %vm969 = vcmp.eq.f32.partialorder %v966, %v968
        %v970 = vsel %vm969, %v965, inf
        %971 = vmin.xlane.f32.xlu0 %v970
        %v972 = vpop.xlane.xlu0 %971
        %v973 = vcvt.f32.s32 %v972
        %v974 = vcvt.f32.s32 %v968
        %v975 = vshll.u32 %v974, 16
        %v976 = vadd.s32 %v975, %v973
        %v977 = vand.u32 %v976, 4294967280
        %v979 = vsel %vm886, %v977, %v957
        %v980 = vand.u32 %v976, 15
        %v981 = vsel %vm886, %v980, %v959
        %vm982 = vcmp.eq.s32.totalorder %v961, %v976
        %v983 = vsel %vm982, 2147483647, %v961
        %v984 = vsel %vm824, %v983, 2147483647
        %v985 = vand.u32 %v984, 65535
        %v986 = vshra.s32 %v984, 16
        %v987 = vcvt.s32.f32 %v985
        %v988 = vcvt.s32.f32 %v986
        %989 = vmin.xlane.f32.xlu0 %v988
        %v990 = vpop.xlane.xlu0 %989
        %vm991 = vcmp.eq.f32.partialorder %v988, %v990
        %v992 = vsel %vm991, %v987, inf
        %993 = vmin.xlane.f32.xlu0 %v992
        %v994 = vpop.xlane.xlu0 %993
        %v995 = vcvt.f32.s32 %v994
        %v996 = vcvt.f32.s32 %v990
        %v997 = vshll.u32 %v996, 16
        %v998 = vadd.s32 %v997, %v995
        %v999 = vand.u32 %v998, 4294967280
        %v1001 = vsel %vm909, %v999, %v979
        %v1002 = vand.u32 %v998, 15
        %v1003 = vsel %vm909, %v1002, %v981
        %v1004 = vlaneseq
        %v1005 = vshrl.u32 %v1004, 7
        %v1006 = vsub.s32 0, %v1005
        %v1007 = vrot.slane %v912, %v1006
        %1009 = vbcast.lane.b32.xlu0 %v1007, 256
        %v1010 = vpop.permute.xlu0 %1009
        %v1011 = vlaneseq
        %v1012 = vshrl.u32 %v1011, 7
        %v1013 = vsub.s32 1, %v1012
        %v1014 = vrot.slane %v912, %v1013
        %1016 = vbcast.lane.b32.xlu0 %v1014, 256
        %v1017 = vpop.permute.xlu0 %1016
        %v1018 = vlaneseq
        %v1019 = vshrl.u32 %v1018, 7
        %v1020 = vsub.s32 2, %v1019
        %v1021 = vrot.slane %v912, %v1020
        %1023 = vbcast.lane.b32.xlu0 %v1021, 256
        %v1024 = vpop.permute.xlu0 %1023
        %v1025 = vlaneseq
        %v1026 = vshrl.u32 %v1025, 7
        %v1027 = vsub.s32 3, %v1026
        %v1028 = vrot.slane %v912, %v1027
        %1030 = vbcast.lane.b32.xlu0 %v1028, 256
        %v1031 = vpop.permute.xlu0 %1030
        %v1032 = vlaneseq
        %v1033 = vshrl.u32 %v1032, 7
        %v1034 = vsub.s32 4, %v1033
        %v1035 = vrot.slane %v912, %v1034
        %1037 = vbcast.lane.b32.xlu0 %v1035, 256
        %v1038 = vpop.permute.xlu0 %1037
        %v1039 = vlaneseq
        %v1040 = vshrl.u32 %v1039, 7
        %v1041 = vsub.s32 5, %v1040
        %v1042 = vrot.slane %v912, %v1041
        %1044 = vbcast.lane.b32.xlu0 %v1042, 256
        %v1045 = vpop.permute.xlu0 %1044
        %v1046 = vlaneseq
        %v1047 = vshrl.u32 %v1046, 7
        %v1048 = vsub.s32 6, %v1047
        %v1049 = vrot.slane %v912, %v1048
        %1051 = vbcast.lane.b32.xlu0 %v1049, 256
        %v1052 = vpop.permute.xlu0 %1051
        %v1053 = vlaneseq
        %v1054 = vshrl.u32 %v1053, 7
        %v1055 = vsub.s32 7, %v1054
        %v1056 = vrot.slane %v912, %v1055
        %1058 = vbcast.lane.b32.xlu0 %v1056, 256
        %v1059 = vpop.permute.xlu0 %1058
        %v1061 = vcombine.high %v1001, %v1001
        %v1063 = vunpack.c.l.s4 1966171168
        %v1064 = vunpack.c.0.s8 %v1063
        %v1065 = vlaneseq
        %v1066 = vshrl.u32 %v1065, 7
        %v1067 = vsub.s32 %v1064, %v1066
        %v1068 = vrot.slane %v1001, %v1067
        %v1070 = vunpack.c.l.s4 1966171168
        %v1071 = vunpack.c.0.s8 %v1070
        %v1072 = vlaneseq
        %v1073 = vshrl.u32 %v1072, 7
        %v1074 = vsub.s32 %v1071, %v1073
        %v1075 = vrot.slane %v1061, %v1074
        %v1076 = vcombine.high %v1068, %v1068
        %v1077 = vcombine.high %v1075, %v1075
        %v1079 = vunpack.c.l.s4 1966171168
        %v1080 = vunpack.c.0.s8 %v1079
        %v1081 = vlaneseq
        %v1082 = vshrl.u32 %v1081, 7
        %v1083 = vsub.s32 %v1080, %v1082
        %v1084 = vrot.slane %v1068, %v1083
        %v1086 = vunpack.c.l.s4 1966171168
        %v1087 = vunpack.c.0.s8 %v1086
        %v1088 = vlaneseq
        %v1089 = vshrl.u32 %v1088, 7
        %v1090 = vsub.s32 %v1087, %v1089
        %v1091 = vrot.slane %v1075, %v1090
        %v1093 = vunpack.c.l.s4 1966171168
        %v1094 = vunpack.c.0.s8 %v1093
        %v1095 = vlaneseq
        %v1096 = vshrl.u32 %v1095, 7
        %v1097 = vsub.s32 %v1094, %v1096
        %v1098 = vrot.slane %v1076, %v1097
        %v1100 = vunpack.c.l.s4 1966171168
        %v1101 = vunpack.c.0.s8 %v1100
        %v1102 = vlaneseq
        %v1103 = vshrl.u32 %v1102, 7
        %v1104 = vsub.s32 %v1101, %v1103
        %v1105 = vrot.slane %v1077, %v1104
        %v1106 = vcombine.high %v1084, %v1084
        %v1107 = vcombine.high %v1091, %v1091
        %v1108 = vcombine.high %v1098, %v1098
        %v1109 = vcombine.high %v1105, %v1105
        %v1110 = vlaneseq
        %v1111 = vshrl.u32 %v1110, 7
        %v1112 = vsub.s32 0, %v1111
        %v1113 = vrot.slane %v1084, %v1112
        %v1114 = vlaneseq
        %v1115 = vshrl.u32 %v1114, 7
        %v1116 = vsub.s32 0, %v1115
        %v1117 = vrot.slane %v1098, %v1116
        %v1118 = vlaneseq
        %v1119 = vshrl.u32 %v1118, 7
        %v1120 = vsub.s32 0, %v1119
        %v1121 = vrot.slane %v1106, %v1120
        %v1122 = vlaneseq
        %v1123 = vshrl.u32 %v1122, 7
        %v1124 = vsub.s32 0, %v1123
        %v1125 = vrot.slane %v1108, %v1124
        %v1126 = vlaneseq
        %v1127 = vshrl.u32 %v1126, 7
        %v1128 = vsub.s32 0, %v1127
        %v1129 = vrot.slane %v1091, %v1128
        %v1130 = vlaneseq
        %v1131 = vshrl.u32 %v1130, 7
        %v1132 = vsub.s32 0, %v1131
        %v1133 = vrot.slane %v1105, %v1132
        %v1134 = vlaneseq
        %v1135 = vshrl.u32 %v1134, 7
        %v1136 = vsub.s32 0, %v1135
        %v1137 = vrot.slane %v1107, %v1136
        %v1138 = vlaneseq
        %v1139 = vshrl.u32 %v1138, 7
        %v1140 = vsub.s32 0, %v1139
        %v1141 = vrot.slane %v1109, %v1140
        %v1150 = vadd.f32 %v1010, %v1113
        %v1151 = vadd.f32 %v1017, %v1117
        %v1152 = vadd.f32 %v1024, %v1121
        %v1153 = vadd.f32 %v1031, %v1125
        %v1154 = vadd.f32 %v1038, %v1129
        %v1155 = vadd.f32 %v1045, %v1133
        %v1156 = vadd.f32 %v1052, %v1137
        %v1157 = vadd.f32 %v1059, %v1141
        %v1158 = vcombine.low %v1150, %v1152
        %v1160 = vunpack.c.l.s4 1983009808
        %v1161 = vunpack.c.0.s8 %v1160
        %v1162 = vlaneseq
        %v1163 = vshrl.u32 %v1162, 7
        %v1164 = vsub.s32 %v1161, %v1163
        %v1165 = vrot.slane %v1158, %v1164
        %v1166 = vcombine.low %v1151, %v1153
        %v1168 = vunpack.c.l.s4 1983009808
        %v1169 = vunpack.c.0.s8 %v1168
        %v1170 = vlaneseq
        %v1171 = vshrl.u32 %v1170, 7
        %v1172 = vsub.s32 %v1169, %v1171
        %v1173 = vrot.slane %v1166, %v1172
        %v1174 = vcombine.low %v1154, %v1156
        %v1176 = vunpack.c.l.s4 1983009808
        %v1177 = vunpack.c.0.s8 %v1176
        %v1178 = vlaneseq
        %v1179 = vshrl.u32 %v1178, 7
        %v1180 = vsub.s32 %v1177, %v1179
        %v1181 = vrot.slane %v1174, %v1180
        %v1182 = vcombine.low %v1155, %v1157
        %v1184 = vunpack.c.l.s4 1983009808
        %v1185 = vunpack.c.0.s8 %v1184
        %v1186 = vlaneseq
        %v1187 = vshrl.u32 %v1186, 7
        %v1188 = vsub.s32 %v1185, %v1187
        %v1189 = vrot.slane %v1182, %v1188
        %v1190 = vcombine.low %v1165, %v1173
        %v1191 = vcombine.high %v1165, %v1173
        %v1193 = vunpack.c.l.s4 1934713408
        %v1194 = vunpack.c.0.s8 %v1193
        %v1195 = vlaneseq
        %v1196 = vshrl.u32 %v1195, 7
        %v1197 = vsub.s32 %v1194, %v1196
        %v1198 = vrot.slane %v1190, %v1197
        %v1200 = vunpack.c.l.s4 1934713408
        %v1201 = vunpack.c.0.s8 %v1200
        %v1202 = vlaneseq
        %v1203 = vshrl.u32 %v1202, 7
        %v1204 = vsub.s32 %v1201, %v1203
        %v1205 = vrot.slane %v1191, %v1204
        %v1206 = vcombine.low %v1181, %v1189
        %v1207 = vcombine.high %v1181, %v1189
        %v1209 = vunpack.c.l.s4 1934713408
        %v1210 = vunpack.c.0.s8 %v1209
        %v1211 = vlaneseq
        %v1212 = vshrl.u32 %v1211, 7
        %v1213 = vsub.s32 %v1210, %v1212
        %v1214 = vrot.slane %v1206, %v1213
        %v1216 = vunpack.c.l.s4 1934713408
        %v1217 = vunpack.c.0.s8 %v1216
        %v1218 = vlaneseq
        %v1219 = vshrl.u32 %v1218, 7
        %v1220 = vsub.s32 %v1217, %v1219
        %v1221 = vrot.slane %v1207, %v1220
        %v1222 = vcombine.low %v1198, %v1214
        %v1223 = vcombine.high %v1198, %v1214
        %v1224 = vcombine.low %v1205, %v1221
        %v1225 = vcombine.high %v1205, %v1221
        %1227 = vrot.lane.b32.xlu0 %v1223, 4
        %v1228 = vpop.permute.xlu0 %1227
        %1231 = vrot.lane.b32.xlu0 %v1224, 8
        %v1232 = vpop.permute.xlu0 %1231
        %1235 = vrot.lane.b32.xlu0 %v1225, 12
        %v1236 = vpop.permute.xlu0 %1235
        %vm1238 = vcmask 31744
        %v1239 = vsel %vm1238, %v1222, %v1228
        %v1240 = vsel %vm500, %v1239, %v1232
        %vm1241 = vcmask 97280
        %v1242 = vsel %vm1241, %v1240, %v1236
        %v1243 = vlaneseq
        %v1244 = vshrl.u32 %v1243, 7
        %v1245 = vsub.s32 0, %v1244
        %v1246 = vrot.slane %v914, %v1245
        %1248 = vbcast.lane.b32.xlu0 %v1246, 256
        %v1249 = vpop.permute.xlu0 %1248
        %v1250 = vlaneseq
        %v1251 = vshrl.u32 %v1250, 7
        %v1252 = vsub.s32 1, %v1251
        %v1253 = vrot.slane %v914, %v1252
        %1255 = vbcast.lane.b32.xlu0 %v1253, 256
        %v1256 = vpop.permute.xlu0 %1255
        %v1257 = vlaneseq
        %v1258 = vshrl.u32 %v1257, 7
        %v1259 = vsub.s32 2, %v1258
        %v1260 = vrot.slane %v914, %v1259
        %1262 = vbcast.lane.b32.xlu0 %v1260, 256
        %v1263 = vpop.permute.xlu0 %1262
        %v1264 = vlaneseq
        %v1265 = vshrl.u32 %v1264, 7
        %v1266 = vsub.s32 3, %v1265
        %v1267 = vrot.slane %v914, %v1266
        %1269 = vbcast.lane.b32.xlu0 %v1267, 256
        %v1270 = vpop.permute.xlu0 %1269
        %v1271 = vlaneseq
        %v1272 = vshrl.u32 %v1271, 7
        %v1273 = vsub.s32 4, %v1272
        %v1274 = vrot.slane %v914, %v1273
        %1276 = vbcast.lane.b32.xlu0 %v1274, 256
        %v1277 = vpop.permute.xlu0 %1276
        %v1278 = vlaneseq
        %v1279 = vshrl.u32 %v1278, 7
        %v1280 = vsub.s32 5, %v1279
        %v1281 = vrot.slane %v914, %v1280
        %1283 = vbcast.lane.b32.xlu0 %v1281, 256
        %v1284 = vpop.permute.xlu0 %1283
        %v1285 = vlaneseq
        %v1286 = vshrl.u32 %v1285, 7
        %v1287 = vsub.s32 6, %v1286
        %v1288 = vrot.slane %v914, %v1287
        %1290 = vbcast.lane.b32.xlu0 %v1288, 256
        %v1291 = vpop.permute.xlu0 %1290
        %v1292 = vlaneseq
        %v1293 = vshrl.u32 %v1292, 7
        %v1294 = vsub.s32 7, %v1293
        %v1295 = vrot.slane %v914, %v1294
        %1297 = vbcast.lane.b32.xlu0 %v1295, 256
        %v1298 = vpop.permute.xlu0 %1297
        %v1299 = vmul.u32 %v1249, 16
        %v1300 = vmul.u32 %v1256, 16
        %v1301 = vmul.u32 %v1263, 16
        %v1302 = vmul.u32 %v1270, 16
        %v1303 = vmul.u32 %v1277, 16
        %v1304 = vmul.u32 %v1284, 16
        %v1305 = vmul.u32 %v1291, 16
        %v1306 = vmul.u32 %v1298, 16
        %v1307 = vcombine.high %v1003, %v1003
        %v1309 = vunpack.c.l.s4 1966171168
        %v1310 = vunpack.c.0.s8 %v1309
        %v1311 = vlaneseq
        %v1312 = vshrl.u32 %v1311, 7
        %v1313 = vsub.s32 %v1310, %v1312
        %v1314 = vrot.slane %v1003, %v1313
        %v1316 = vunpack.c.l.s4 1966171168
        %v1317 = vunpack.c.0.s8 %v1316
        %v1318 = vlaneseq
        %v1319 = vshrl.u32 %v1318, 7
        %v1320 = vsub.s32 %v1317, %v1319
        %v1321 = vrot.slane %v1307, %v1320
        %v1322 = vcombine.high %v1314, %v1314
        %v1323 = vcombine.high %v1321, %v1321
        %v1325 = vunpack.c.l.s4 1966171168
        %v1326 = vunpack.c.0.s8 %v1325
        %v1327 = vlaneseq
        %v1328 = vshrl.u32 %v1327, 7
        %v1329 = vsub.s32 %v1326, %v1328
        %v1330 = vrot.slane %v1314, %v1329
        %v1332 = vunpack.c.l.s4 1966171168
        %v1333 = vunpack.c.0.s8 %v1332
        %v1334 = vlaneseq
        %v1335 = vshrl.u32 %v1334, 7
        %v1336 = vsub.s32 %v1333, %v1335
        %v1337 = vrot.slane %v1321, %v1336
        %v1339 = vunpack.c.l.s4 1966171168
        %v1340 = vunpack.c.0.s8 %v1339
        %v1341 = vlaneseq
        %v1342 = vshrl.u32 %v1341, 7
        %v1343 = vsub.s32 %v1340, %v1342
        %v1344 = vrot.slane %v1322, %v1343
        %v1346 = vunpack.c.l.s4 1966171168
        %v1347 = vunpack.c.0.s8 %v1346
        %v1348 = vlaneseq
        %v1349 = vshrl.u32 %v1348, 7
        %v1350 = vsub.s32 %v1347, %v1349
        %v1351 = vrot.slane %v1323, %v1350
        %v1352 = vcombine.high %v1330, %v1330
        %v1353 = vcombine.high %v1337, %v1337
        %v1354 = vcombine.high %v1344, %v1344
        %v1355 = vcombine.high %v1351, %v1351
        %v1356 = vlaneseq
        %v1357 = vshrl.u32 %v1356, 7
        %v1358 = vsub.s32 0, %v1357
        %v1359 = vrot.slane %v1330, %v1358
        %v1360 = vlaneseq
        %v1361 = vshrl.u32 %v1360, 7
        %v1362 = vsub.s32 0, %v1361
        %v1363 = vrot.slane %v1344, %v1362
        %v1364 = vlaneseq
        %v1365 = vshrl.u32 %v1364, 7
        %v1366 = vsub.s32 0, %v1365
        %v1367 = vrot.slane %v1352, %v1366
        %v1368 = vlaneseq
        %v1369 = vshrl.u32 %v1368, 7
        %v1370 = vsub.s32 0, %v1369
        %v1371 = vrot.slane %v1354, %v1370
        %v1372 = vlaneseq
        %v1373 = vshrl.u32 %v1372, 7
        %v1374 = vsub.s32 0, %v1373
        %v1375 = vrot.slane %v1337, %v1374
        %v1376 = vlaneseq
        %v1377 = vshrl.u32 %v1376, 7
        %v1378 = vsub.s32 0, %v1377
        %v1379 = vrot.slane %v1351, %v1378
        %v1380 = vlaneseq
        %v1381 = vshrl.u32 %v1380, 7
        %v1382 = vsub.s32 0, %v1381
        %v1383 = vrot.slane %v1353, %v1382
        %v1384 = vlaneseq
        %v1385 = vshrl.u32 %v1384, 7
        %v1386 = vsub.s32 0, %v1385
        %v1387 = vrot.slane %v1355, %v1386
        %v1388 = vadd.s32 %v1299, %v1359
        %v1389 = vadd.s32 %v1300, %v1363
        %v1390 = vadd.s32 %v1301, %v1367
        %v1391 = vadd.s32 %v1302, %v1371
        %v1392 = vadd.s32 %v1303, %v1375
        %v1393 = vadd.s32 %v1304, %v1379
        %v1394 = vadd.s32 %v1305, %v1383
        %v1395 = vadd.s32 %v1306, %v1387
        %v1396 = vcombine.low %v1388, %v1390
        %v1398 = vunpack.c.l.s4 1983009808
        %v1399 = vunpack.c.0.s8 %v1398
        %v1400 = vlaneseq
        %v1401 = vshrl.u32 %v1400, 7
        %v1402 = vsub.s32 %v1399, %v1401
        %v1403 = vrot.slane %v1396, %v1402
        %v1404 = vcombine.low %v1389, %v1391
        %v1406 = vunpack.c.l.s4 1983009808
        %v1407 = vunpack.c.0.s8 %v1406
        %v1408 = vlaneseq
        %v1409 = vshrl.u32 %v1408, 7
        %v1410 = vsub.s32 %v1407, %v1409
        %v1411 = vrot.slane %v1404, %v1410
        %v1412 = vcombine.low %v1392, %v1394
        %v1414 = vunpack.c.l.s4 1983009808
        %v1415 = vunpack.c.0.s8 %v1414
        %v1416 = vlaneseq
        %v1417 = vshrl.u32 %v1416, 7
        %v1418 = vsub.s32 %v1415, %v1417
        %v1419 = vrot.slane %v1412, %v1418
        %v1420 = vcombine.low %v1393, %v1395
        %v1422 = vunpack.c.l.s4 1983009808
        %v1423 = vunpack.c.0.s8 %v1422
        %v1424 = vlaneseq
        %v1425 = vshrl.u32 %v1424, 7
        %v1426 = vsub.s32 %v1423, %v1425
        %v1427 = vrot.slane %v1420, %v1426
        %v1428 = vcombine.low %v1403, %v1411
        %v1429 = vcombine.high %v1403, %v1411
        %v1431 = vunpack.c.l.s4 1934713408
        %v1432 = vunpack.c.0.s8 %v1431
        %v1433 = vlaneseq
        %v1434 = vshrl.u32 %v1433, 7
        %v1435 = vsub.s32 %v1432, %v1434
        %v1436 = vrot.slane %v1428, %v1435
        %v1438 = vunpack.c.l.s4 1934713408
        %v1439 = vunpack.c.0.s8 %v1438
        %v1440 = vlaneseq
        %v1441 = vshrl.u32 %v1440, 7
        %v1442 = vsub.s32 %v1439, %v1441
        %v1443 = vrot.slane %v1429, %v1442
        %v1444 = vcombine.low %v1419, %v1427
        %v1445 = vcombine.high %v1419, %v1427
        %v1447 = vunpack.c.l.s4 1934713408
        %v1448 = vunpack.c.0.s8 %v1447
        %v1449 = vlaneseq
        %v1450 = vshrl.u32 %v1449, 7
        %v1451 = vsub.s32 %v1448, %v1450
        %v1452 = vrot.slane %v1444, %v1451
        %v1454 = vunpack.c.l.s4 1934713408
        %v1455 = vunpack.c.0.s8 %v1454
        %v1456 = vlaneseq
        %v1457 = vshrl.u32 %v1456, 7
        %v1458 = vsub.s32 %v1455, %v1457
        %v1459 = vrot.slane %v1445, %v1458
        %v1460 = vcombine.low %v1436, %v1452
        %v1461 = vcombine.high %v1436, %v1452
        %v1462 = vcombine.low %v1443, %v1459
        %v1463 = vcombine.high %v1443, %v1459
        %1464 = vrot.lane.b32.xlu0 %v1461, 4
        %v1465 = vpop.permute.xlu0 %1464
        %1466 = vrot.lane.b32.xlu0 %v1462, 8
        %v1467 = vpop.permute.xlu0 %1466
        %1468 = vrot.lane.b32.xlu0 %v1463, 12
        %v1469 = vpop.permute.xlu0 %1468
        %v1470 = vsel %vm1238, %v1460, %v1465
        %v1471 = vsel %vm500, %v1470, %v1467
        %v1472 = vsel %vm1241, %v1471, %v1469
        %v1474 = vand.u32 %v1242, 4294967280
        %v1475 = vor.u32 %v1474, %v374
        %v1476 = vsel %vm824, %v1475, 2147483647
        %v1477 = vand.u32 %v1476, 65535
        %v1478 = vshra.s32 %v1476, 16
        %v1479 = vcvt.s32.f32 %v1477
        %v1480 = vcvt.s32.f32 %v1478
        %1481 = vmin.xlane.f32.xlu0 %v1480
        %v1482 = vpop.xlane.xlu0 %1481
        %vm1483 = vcmp.eq.f32.partialorder %v1480, %v1482
        %v1484 = vsel %vm1483, %v1479, inf
        %1485 = vmin.xlane.f32.xlu0 %v1484
        %v1486 = vpop.xlane.xlu0 %1485
        %v1487 = vcvt.f32.s32 %v1486
        %v1488 = vcvt.f32.s32 %v1482
        %v1489 = vshll.u32 %v1488, 16
        %v1490 = vadd.s32 %v1489, %v1487
        %vm1491 = vcmp.eq.s32.totalorder %v1475, %v1490
        %v1492 = vsel %vm1491, %v1472, 0
        %v1493 = vsel %vm824, %v1492, 0
        %v1494 = vand.u32 %v1493, 65535
        %v1495 = vshrl.u32 %v1493, 16
        %v1496 = vcvt.s32.f32 %v1494
        %v1497 = vcvt.s32.f32 %v1495
        %1498 = vadd.xlane.f32.xlu0 %v1496
        %v1499 = vpop.xlane.xlu0 %1498
        %1500 = vadd.xlane.f32.xlu0 %v1497
        %v1501 = vpop.xlane.xlu0 %1500
        %v1502 = vcvt.f32.s32 %v1499
        %v1503 = vcvt.f32.s32 %v1501
        %v1504 = vshll.u32 %v1503, 16
        %v1505 = vadd.s32 %v1504, %v1502
        %v1506 = vand.u32 %v1490, 4294967280
        %v1508 = vsel %vm840, %v1506, 0.0
        %v1509 = vsel %vm840, %v1505, 0
        %v1510 = vsel %vm1491, 2147483647, %v1475
        %v1511 = vsel %vm824, %v1510, 2147483647
        %v1512 = vand.u32 %v1511, 65535
        %v1513 = vshra.s32 %v1511, 16
        %v1514 = vcvt.s32.f32 %v1512
        %v1515 = vcvt.s32.f32 %v1513
        %1516 = vmin.xlane.f32.xlu0 %v1515
        %v1517 = vpop.xlane.xlu0 %1516
        %vm1518 = vcmp.eq.f32.partialorder %v1515, %v1517
        %v1519 = vsel %vm1518, %v1514, inf
        %1520 = vmin.xlane.f32.xlu0 %v1519
        %v1521 = vpop.xlane.xlu0 %1520
        %v1522 = vcvt.f32.s32 %v1521
        %v1523 = vcvt.f32.s32 %v1517
        %v1524 = vshll.u32 %v1523, 16
        %v1525 = vadd.s32 %v1524, %v1522
        %vm1526 = vcmp.eq.s32.totalorder %v1510, %v1525
        %v1527 = vsel %vm1526, %v1472, 0
        %v1528 = vsel %vm824, %v1527, 0
        %v1529 = vand.u32 %v1528, 65535
        %v1530 = vshrl.u32 %v1528, 16
        %v1531 = vcvt.s32.f32 %v1529
        %v1532 = vcvt.s32.f32 %v1530
        %1533 = vadd.xlane.f32.xlu0 %v1531
        %v1534 = vpop.xlane.xlu0 %1533
        %1535 = vadd.xlane.f32.xlu0 %v1532
        %v1536 = vpop.xlane.xlu0 %1535
        %v1537 = vcvt.f32.s32 %v1534
        %v1538 = vcvt.f32.s32 %v1536
        %v1539 = vshll.u32 %v1538, 16
        %v1540 = vadd.s32 %v1539, %v1537
        %v1541 = vand.u32 %v1525, 4294967280
        %v1543 = vsel %vm863, %v1541, %v1508
        %v1544 = vsel %vm863, %v1540, %v1509
        %v1545 = vsel %vm1526, 2147483647, %v1510
        %v1546 = vsel %vm824, %v1545, 2147483647
        %v1547 = vand.u32 %v1546, 65535
        %v1548 = vshra.s32 %v1546, 16
        %v1549 = vcvt.s32.f32 %v1547
        %v1550 = vcvt.s32.f32 %v1548
        %1551 = vmin.xlane.f32.xlu0 %v1550
        %v1552 = vpop.xlane.xlu0 %1551
        %vm1553 = vcmp.eq.f32.partialorder %v1550, %v1552
        %v1554 = vsel %vm1553, %v1549, inf
        %1555 = vmin.xlane.f32.xlu0 %v1554
        %v1556 = vpop.xlane.xlu0 %1555
        %v1557 = vcvt.f32.s32 %v1556
        %v1558 = vcvt.f32.s32 %v1552
        %v1559 = vshll.u32 %v1558, 16
        %v1560 = vadd.s32 %v1559, %v1557
        %vm1561 = vcmp.eq.s32.totalorder %v1545, %v1560
        %v1562 = vsel %vm1561, %v1472, 0
        %v1563 = vsel %vm824, %v1562, 0
        %v1564 = vand.u32 %v1563, 65535
        %v1565 = vshrl.u32 %v1563, 16
        %v1566 = vcvt.s32.f32 %v1564
        %v1567 = vcvt.s32.f32 %v1565
        %1568 = vadd.xlane.f32.xlu0 %v1566
        %v1569 = vpop.xlane.xlu0 %1568
        %1570 = vadd.xlane.f32.xlu0 %v1567
        %v1571 = vpop.xlane.xlu0 %1570
        %v1572 = vcvt.f32.s32 %v1569
        %v1573 = vcvt.f32.s32 %v1571
        %v1574 = vshll.u32 %v1573, 16
        %v1575 = vadd.s32 %v1574, %v1572
        %v1576 = vand.u32 %v1560, 4294967280
        %v1578 = vsel %vm886, %v1576, %v1543
        %v1579 = vsel %vm886, %v1575, %v1544
        %v1580 = vsel %vm1561, 2147483647, %v1545
        %v1581 = vsel %vm824, %v1580, 2147483647
        %v1582 = vand.u32 %v1581, 65535
        %v1583 = vshra.s32 %v1581, 16
        %v1584 = vcvt.s32.f32 %v1582
        %v1585 = vcvt.s32.f32 %v1583
        %1586 = vmin.xlane.f32.xlu0 %v1585
        %v1587 = vpop.xlane.xlu0 %1586
        %vm1588 = vcmp.eq.f32.partialorder %v1585, %v1587
        %v1589 = vsel %vm1588, %v1584, inf
        %1590 = vmin.xlane.f32.xlu0 %v1589
        %v1591 = vpop.xlane.xlu0 %1590
        %v1592 = vcvt.f32.s32 %v1591
        %v1593 = vcvt.f32.s32 %v1587
        %v1594 = vshll.u32 %v1593, 16
        %v1595 = vadd.s32 %v1594, %v1592
        %vm1596 = vcmp.eq.s32.totalorder %v1580, %v1595
        %v1597 = vsel %vm1596, %v1472, 0
        %v1598 = vsel %vm824, %v1597, 0
        %v1599 = vand.u32 %v1598, 65535
        %v1600 = vshrl.u32 %v1598, 16
        %v1601 = vcvt.s32.f32 %v1599
        %v1602 = vcvt.s32.f32 %v1600
        %1603 = vadd.xlane.f32.xlu0 %v1601
        %v1604 = vpop.xlane.xlu0 %1603
        %1605 = vadd.xlane.f32.xlu0 %v1602
        %v1606 = vpop.xlane.xlu0 %1605
        %v1607 = vcvt.f32.s32 %v1604
        %v1608 = vcvt.f32.s32 %v1606
        %v1609 = vshll.u32 %v1608, 16
        %v1610 = vadd.s32 %v1609, %v1607
        %v1611 = vand.u32 %v1595, 4294967280
        %v1613 = vsel %vm909, %v1611, %v1578
        %v1614 = vsel %vm909, %v1610, %v1579
        %v1615 = vrsqrt.pop %v1613
        %v1616 = vmul.f32 %v1613, %v1615
        %vm1617 = vcmp.eq.f32.partialorder %v1613, inf
        %v1618 = vsel %vm1617, %v1613, %v1616
        %vm1619 = vcmp.eq.f32.partialorder %v1613, 0.0
        %v1620 = vand.u32 %v1613, 2147483648
        %v1621 = vsel %vm1619, %v1620, %v1618
        %v1622 = vsub.f32 0.0, %v1621
        %1623 = vset.pattern.permute.xlu0 32
        %1624 = vperm.xlu0 %1623, %v477
        %v1625 = vpop.permute.xlu0 %1624
        %v1627 = vmul.f32 %v1622, %v1625
        %v1628 = vsel %vm1238, %v1627, -inf
        %1629 = vmax.xlane.f32.xlu0 %v1628
        %v1630 = vpop.xlane.xlu0 %1629
        %v1631 = vsub.f32 %v1627, %v1630
        %v1632 = vmul.f32 %v1631, 1.442695
        %v1633 = vpow.pop %v1632
        %v1634 = vsel %vm1238, %v1633, 0.0
        %1635 = vadd.xlane.f32.xlu0 %v1634
        %v1636 = vpop.xlane.xlu0 %1635
        %v1637 = vrcp.pop %v1636
        %v1638 = vmul.f32 %v1633, %v1637
        %v1639 = vmul.u32 %v397, 256
        %v1640 = vadd.s32 %v1614, %v1639
        %1642 = vrot.lane.b32.xlu0 %v1640, 4
        %v1643 = vpop.permute.xlu0 %1642
        %v1644 = vsel %vm1238, %v1638, %v1643
        %1645 = vst.msk [vmem:[%s286] sm:$0xff] %vm500, %v1644
        %p1646 = scmp.lt.s32.totalorder %s19, 1
        %s1647 = scalar_select %p1646, %s19, 1
        %s1648 = smul.addr %s1647, 8
        %s1649 = scalar_lea.vmem %s6, %s1648
        // Predicated region
        $region57: #{lopkm_forward.1} parent=43 // pred_check
          %p1650 = pneg %p168
        $region58: #{lopkm_forward.1} parent=43 // pred_check_branch
          %1652 = sbr.rel (%p1650) target = $region60
        $region59: #{lopkm_forward.1} parent=43 // pred_region
          _
        $region60: #{lopkm_forward.1} parent=43 // pred_fallthru
          _
      $region44: #{lopkm_forward.1} parent=5 // pred_fallthru
        _
      %p1653 = scmp.le.s32.totalorder 2, %s14
      // Predicated region
      $region61: #{lopkm_forward.1} parent=5 // pred_check
        %p1654 = pneg %p1653
      $region62: #{lopkm_forward.1} parent=5 // pred_check_branch
        %1656 = sbr.rel (%p1654) target = $region64
      $region63: #{lopkm_forward.1} parent=5 // pred_region
        %s1657 = ssub.s32 %s14, 2
        // Predicated region
        $region65: #{lopkm_forward.1} parent=63 // pred_check
          %p1658 = pneg %p174
        $region66: #{lopkm_forward.1} parent=63 // pred_check_branch
          %1660 = sbr.rel (%p1658) target = $region68
        $region67: #{lopkm_forward.1} parent=63 // pred_region
          %p1661 = scmp.lt.s32.totalorder %s20, 1
          %s1662 = scalar_select %p1661, %s20, 1
          %s1663 = smul.addr %s1662, 8
          %s1664 = scalar_lea.vmem %s6, %s1663
        $region68: #{lopkm_forward.1} parent=63 // pred_fallthru
          _
      $region64: #{lopkm_forward.1} parent=5 // pred_fallthru
        _
    $region6: #{lopkm_forward.1} parent=1 // loop_footer
      %s18 = sadd.s32 1, %s14
    $region7: #{lopkm_forward.1} parent=1 // loop_footer_branch
      %13 = sbr.rel target = $region3
    $region8: #{lopkm_forward.1} parent=1 // loop_exit
      _
    %1665 = vsyncpa [#allocation3], 1
    %s1666 = scalar_lea.sflag [#allocation3], 1
    %1667 = vsyncpa %s1666, 1
    %1668 = vsyncpa [#allocation5], 1

</llo_original>
